<compile_context>
chip_gen: v5e
topology: v5e:2x2
jax: 0.10.0
libtpu: 0.0.40
codegen_flags: <defaults>
</compile_context>

<pallas_src>
import functools

import jax
import jax.numpy as jnp
from jax import lax
from jax.experimental import pallas as pl
from jax.experimental.pallas import tpu as pltpu


def _erf_approx(x):
    """Abramowitz & Stegun 7.1.26 erf approximation (poly err ~1.5e-7).

    Only mul/add/exp (VPU/EUP).  The reciprocal is issued as an EUP approx
    reciprocal and refined with one Newton step, keeping the VALU slots free
    while staying ~1e-6 accurate."""
    p = 0.3275911
    a1, a2, a3, a4, a5 = (0.254829592, -0.284496736, 1.421413741,
                          -1.453152027, 1.061405429)
    sgn = jnp.where(x >= 0.0, 1.0, -1.0)
    ax = jnp.abs(x)
    d = 1.0 + p * ax
    r = pl.reciprocal(d, approx=True)          # EUP slot (otherwise only exp uses it)
    t = r * (2.0 - d * r)                      # one Newton step -> ~1e-6 rel error
    poly = ((((a5 * t + a4) * t + a3) * t + a2) * t + a1) * t
    return sgn * (1.0 - poly * jnp.exp(-ax * ax))


def _gelu_exact(x):
    # Matches torch.nn.GELU() (approximate='none'): 0.5 * x * (1 + erf(x/sqrt(2)))
    return 0.5 * x * (1.0 + _erf_approx(x * 0.7071067811865476))


def _hint_multiple(idx, m):
    """pl.multiple_of alignment hint that tolerates static Python ints."""
    if isinstance(idx, int):
        return idx
    return pl.multiple_of(idx, m)


def _mixffn_kernel(x_mid_ref, x_top_ref, x_bot_ref,
                   w1_ref, b1_ref, wd_ref, bd_ref,
                   g_ref, beta_ref, w2_ref, b2_ref,
                   o_ref, hs_ref, *, TH, W, RC):
    # Per grid step (b, t):
    #   x_mid_ref : (1, TH, W, C1)  rows of this strip
    #   x_top_ref : (1, 1,  W, C1)  row above the strip (clamped at image top)
    #   x_bot_ref : (1, 1,  W, C1)  row below the strip (clamped at image bottom)
    #   w1_ref    : (C1, C2)   b1_ref : (1, C2)          fc1
    #   wd_ref    : (9, C2)    bd_ref : (1, C2)          depthwise 3x3, tap = kh*3+kw
    #   g_ref/beta_ref : (1, C2)                         LayerNorm affine
    #   w2_ref    : (C2, C1)   b2_ref : (1, C1)          fc2
    #   o_ref     : (1, TH, W, C1)
    #   hs_ref    : (TH+2, W, C2) f32 scratch = fc1 output for strip + halo rows
    t = pl.program_id(1)
    nt = pl.num_programs(1)
    C1 = o_ref.shape[-1]
    C2 = hs_ref.shape[-1]

    # ---- fc1: ONE matmul over strip + halo rows (operands in stored dtype,
    #      f32 accumulation), single store into the f32 scratch ----------------
    x_cat = jnp.concatenate(
        [x_top_ref[0, 0],                       # (W, C1)    row above (clamped)
         x_mid_ref[0].reshape(TH * W, C1),      # (TH*W, C1) strip rows
         x_bot_ref[0, 0]],                      # (W, C1)    row below (clamped)
        axis=0)                                 # ((TH+2)*W, C1)
    h_all = jnp.dot(x_cat, w1_ref[...], preferred_element_type=jnp.float32)
    h_all = h_all + b1_ref[...].astype(jnp.float32)
    hs_ref[...] = h_all.reshape(TH + 2, W, C2)

    # Conv zero-padding applies to the *fc1 output*: zero the halo rows only at
    # the image top/bottom.
    @pl.when(t == 0)
    def _():
        hs_ref[0] = jnp.zeros((W, C2), jnp.float32)

    @pl.when(t == nt - 1)
    def _():
        hs_ref[TH + 1] = jnp.zeros((W, C2), jnp.float32)

    # ---- per-strip constants --------------------------------------------------
    wd = wd_ref[...].astype(jnp.float32)       # (9, C2), tap index = kh*3 + kw
    bd = bd_ref[...].astype(jnp.float32)       # (1, C2)
    gamma = g_ref[...].astype(jnp.float32)     # (1, C2)
    beta = beta_ref[...].astype(jnp.float32)   # (1, C2)
    w2 = w2_ref[...]                           # stored dtype -> MXU fast path
    b2 = b2_ref[...].astype(jnp.float32)       # (1, C1)

    # Narrow edge masks, folded into the left/right tap weights once per strip:
    # the chunk loop then needs a single vmul per tap (no iota / where inside).
    col = lax.broadcasted_iota(jnp.int32, (1, W, C2), 1)
    m_first = (col > 0).astype(jnp.float32)        # kills the w-1 tap at w == 0
    m_last = (col < W - 1).astype(jnp.float32)     # kills the w+1 tap at w == W-1
    w_left = [wd[kh * 3 + 0] * m_first for kh in range(3)]    # (1, W, C2) each
    w_right = [wd[kh * 3 + 2] * m_last for kh in range(3)]    # (1, W, C2) each

    # ---- conv + skip + LN + GELU + fc2, over RC-row chunks --------------------
    # Chunking bounds the f32 temporaries (acc / y / act) to RC rows so large
    # strips never spill the 64-vreg file, while fc2 still sees M = RC*W.
    def epilogue(r0):
        rows = hs_ref[pl.ds(r0, RC + 2)]               # (RC+2, W, C2) f32
        center = rows[1:RC + 1]                        # (RC, W, C2) = fc1 skip rows
        acc = center * wd[4] + bd                      # center tap + conv bias
        for kh in range(3):
            v = center if kh == 1 else rows[kh:kh + RC]
            if kh != 1:
                acc = acc + v * wd[kh * 3 + 1]                    # kw = 1
            v_r = pltpu.roll(v, shift=W - 1, axis=1)   # v_r[w] = v[w+1]   (XLU)
            acc = acc + v_r * w_right[kh]                          # kw = 2 (masked)
            v_l = pltpu.roll(v, shift=1, axis=1)       # v_l[w] = v[w-1]   (XLU)
            acc = acc + v_l * w_left[kh]                           # kw = 0 (masked)

        y = (acc + center).reshape(RC * W, C2)         # conv + skip
        mu = jnp.mean(y, axis=-1, keepdims=True)
        yc = y - mu
        var = jnp.mean(yc * yc, axis=-1, keepdims=True)
        yn = yc * lax.rsqrt(var + 1e-5) * gamma + beta
        act = _gelu_exact(yn)

        out = jnp.dot(act.astype(w2.dtype), w2, preferred_element_type=jnp.float32)
        out = out + b2
        o_ref[0, pl.ds(r0, RC)] = out.reshape(RC, W, C1).astype(o_ref.dtype)

    n_chunks = TH // RC
    if n_chunks == 1:
        epilogue(0)
    else:
        @pl.loop(0, n_chunks)
        def _(c):
            epilogue(_hint_multiple(c * RC, RC))


def _vmem_budget():
    """(vmem_limit_bytes, per-strip byte budget) derived from the chip's VMEM."""
    cap = 128 * 1024 * 1024
    try:
        cap = int(getattr(pltpu.get_tpu_info(), "vmem_capacity_bytes", cap))
    except Exception:
        pass
    if cap <= 64 * 1024 * 1024:
        # v7x-class: 64 MiB physical per TensorCore -> smaller limit and strips.
        return min(48 * 1024 * 1024, (cap * 3) // 4), 5 * 1024 * 1024
    # v5e / v6e: 128 MiB physical.
    return 96 * 1024 * 1024, 8 * 1024 * 1024


def _pick_tile_h(H, W, c1, c2, io_itemsize, budget_bytes, min_steps=1, max_chunk=8):
    """Largest divisor of H whose per-strip working set (double-buffered in/out
    blocks, f32 fc1 scratch, weights, halo rows and the RC-row chunk temporaries)
    stays under budget_bytes; optionally capped so an image still yields at least
    `min_steps` grid steps (megacore balance when B == 1)."""
    per_row = W * (4 * c1 * io_itemsize + 4 * c2)        # 2x in, 2x out, f32 hs row
    fixed = (4 * c1 * c2 * io_itemsize                   # w1 + w2 (double-buffered)
             + 4 * W * c1 * io_itemsize                  # halo input blocks
             + 2 * W * c2 * 4                            # hs halo rows
             + 8 * max_chunk * W * c2 * 4)               # chunk f32 temporaries
    th = max(1, min(H, (budget_bytes - fixed) // max(per_row, 1)))
    th = min(th, max(1, H // max(min_steps, 1)))
    th = max(1, th)
    while H % th:
        th -= 1
    return int(th)


def mixffn_skip_pallas(x, w1, b1, wd, bd, ln_g, ln_b, w2, b2, H, W, tile_h=None):
    """Fused MixFFN_skip forward.

    x : (B, N, C1) with N = H*W
    w1: (C1, C2), b1: (C2,)                     fc1
    wd: (C2, 3, 3), bd: (C2,)                   depthwise Conv2d(C2, C2, 3, 1, 1, groups=C2)
    ln_g, ln_b: (C2,)                           LayerNorm(C2), eps=1e-5
    w2: (C2, C1), b2: (C1,)                     fc2
    Returns (B, N, C1).
    """
    B, N, C1 = x.shape
    C2 = w1.shape[1]
    assert N == H * W
    # TODO(synk): support W not a multiple of 8 (needs relayout-safe reshapes or W padding).
    assert W % 8 == 0, "W must be a multiple of 8 for the sublane-preserving reshapes"

    vmem_limit, strip_budget = _vmem_budget()
    if tile_h is None:
        tile_h = _pick_tile_h(H, W, C1, C2, x.dtype.itemsize, strip_budget,
                              min_steps=1 if B >= 2 else 2)
    assert H % tile_h == 0, "tile_h must divide H"
    nt = H // tile_h

    # Row chunk for the epilogue: largest divisor of tile_h that is <= 8.
    rc = 1
    for d in range(min(8, tile_h), 0, -1):
        if tile_h % d == 0:
            rc = d
            break

    x4 = x.reshape(B, H, W, C1)
    wd9 = jnp.transpose(wd, (1, 2, 0)).reshape(9, C2)   # tap-major (kh*3+kw, c)
    b1r = b1.reshape(1, C2)
    bdr = bd.reshape(1, C2)
    gr = ln_g.reshape(1, C2)
    br = ln_b.reshape(1, C2)
    b2r = b2.reshape(1, C1)

    kernel = functools.partial(_mixffn_kernel, TH=tile_h, W=W, RC=rc)

    flops = int(B * N * (4 * C1 * C2 + 30 * C2))
    transcendentals = int(B * N * C2)
    bytes_accessed = int(x4.size * x4.dtype.itemsize
                         + B * N * C1 * x.dtype.itemsize
                         + (w1.size + w2.size + wd9.size) * w1.dtype.itemsize
                         + (b1.size + bd.size + ln_g.size + ln_b.size + b2.size)
                         * b1.dtype.itemsize)

    out = pl.pallas_call(
        kernel,
        out_shape=jax.ShapeDtypeStruct((B, H, W, C1), x.dtype),
        grid_spec=pltpu.PrefetchScalarGridSpec(
            num_scalar_prefetch=0,
            grid=(B, nt),
            in_specs=[
                # current strip of x
                pl.BlockSpec((1, tile_h, W, C1), lambda b, t: (b, t, 0, 0)),
                # halo row above (clamped; zero-masked in kernel at the image top)
                pl.BlockSpec((1, 1, W, C1),
                             lambda b, t: (b, jnp.maximum(t * tile_h - 1, 0), 0, 0)),
                # halo row below (clamped; zero-masked in kernel at the image bottom)
                pl.BlockSpec((1, 1, W, C1),
                             lambda b, t: (b, jnp.minimum((t + 1) * tile_h, H - 1), 0, 0)),
                pl.BlockSpec((C1, C2), lambda b, t: (0, 0)),   # w1
                pl.BlockSpec((1, C2), lambda b, t: (0, 0)),    # b1
                pl.BlockSpec((9, C2), lambda b, t: (0, 0)),    # dwconv weight
                pl.BlockSpec((1, C2), lambda b, t: (0, 0)),    # dwconv bias
                pl.BlockSpec((1, C2), lambda b, t: (0, 0)),    # LN gamma
                pl.BlockSpec((1, C2), lambda b, t: (0, 0)),    # LN beta
                pl.BlockSpec((C2, C1), lambda b, t: (0, 0)),   # w2
                pl.BlockSpec((1, C1), lambda b, t: (0, 0)),    # b2
            ],
            out_specs=pl.BlockSpec((1, tile_h, W, C1), lambda b, t: (b, t, 0, 0)),
            scratch_shapes=[pltpu.VMEM((tile_h + 2, W, C2), jnp.float32)],
        ),
        compiler_params=pltpu.CompilerParams(
            dimension_semantics=("parallel", "parallel"),
            vmem_limit_bytes=int(vmem_limit)),
        cost_estimate=pl.CostEstimate(flops=flops,
                                      transcendentals=transcendentals,
                                      bytes_accessed=bytes_accessed),
    )(x4, x4, x4, w1, b1r, wd9, bdr, gr, br, w2, b2r)

    return out.reshape(B, N, C1)


def mixffn_skip_reference(x, w1, b1, wd, bd, ln_g, ln_b, w2, b2, H, W):
    """Pure-JAX reference matching the PyTorch MixFFN_skip forward."""
    B, N, C1 = x.shape
    C2 = w1.shape[1]
    hp = lax.Precision.HIGHEST
    h1 = jnp.dot(x, w1, precision=hp) + b1                        # (B, N, C2)
    himg = jnp.transpose(h1, (0, 2, 1)).reshape(B, C2, H, W)
    d = lax.conv_general_dilated(
        himg, wd.reshape(C2, 1, 3, 3),
        window_strides=(1, 1), padding=((1, 1), (1, 1)),
        feature_group_count=C2,
        dimension_numbers=("NCHW", "OIHW", "NCHW"), precision=hp)
    d = d + bd.reshape(1, C2, 1, 1)
    d = jnp.transpose(d.reshape(B, C2, N), (0, 2, 1))             # (B, N, C2)
    y = d + h1
    mu = jnp.mean(y, axis=-1, keepdims=True)
    var = jnp.mean(jnp.square(y - mu), axis=-1, keepdims=True)
    yn = (y - mu) * lax.rsqrt(var + 1e-5) * ln_g + ln_b
    act = jax.nn.gelu(yn, approximate=False)                      # exact GELU, like nn.GELU()
    return jnp.dot(act, w2, precision=hp) + b2


if __name__ == "__main__":
    B, H, W = 2, 16, 16
    c1, c2 = 16, 32
    N = H * W

    key = jax.random.PRNGKey(0)
    ks = jax.random.split(key, 9)
    x = jax.random.normal(ks[0], (B, N, c1), dtype=jnp.float32)
    w1 = jax.random.normal(ks[1], (c1, c2), dtype=jnp.float32) * (c1 ** -0.5)
    b1 = jax.random.normal(ks[2], (c2,), dtype=jnp.float32) * 0.1
    wd = jax.random.normal(ks[3], (c2, 3, 3), dtype=jnp.float32) * 0.1
    bd = jax.random.normal(ks[4], (c2,), dtype=jnp.float32) * 0.1
    ln_g = 1.0 + 0.1 * jax.random.normal(ks[5], (c2,), dtype=jnp.float32)
    ln_b = 0.1 * jax.random.normal(ks[6], (c2,), dtype=jnp.float32)
    w2 = jax.random.normal(ks[7], (c2, c1), dtype=jnp.float32) * (c2 ** -0.5)
    b2 = jax.random.normal(ks[8], (c1,), dtype=jnp.float32) * 0.1

    ref = jax.block_until_ready(
        mixffn_skip_reference(x, w1, b1, wd, bd, ln_g, ln_b, w2, b2, H, W))

    # (1) explicit small tile: exercises top / interior / bottom halo strips and
    #     the single-chunk epilogue path.
    out_small = jax.block_until_ready(
        mixffn_skip_pallas(x, w1, b1, wd, bd, ln_g, ln_b, w2, b2, H, W, tile_h=4))
    # (2) auto (VMEM-budget) tile: full-height strip, multi-chunk epilogue path.
    out_auto = jax.block_until_ready(
        mixffn_skip_pallas(x, w1, b1, wd, bd, ln_g, ln_b, w2, b2, H, W))

    for out in (out_small, out_auto):
        assert out.shape == (B, N, c1)
        err = float(jnp.max(jnp.abs(out - ref)))
        assert jnp.allclose(out, ref, atol=2e-4, rtol=2e-4), (
            "mismatch vs reference: max abs err = %e" % err)

    print("KERNEL_OK")
</pallas_src>

<mosaic_0001>
module attributes {stable_mosaic.version = 11 : i64} {
  func.func @_mixffn_kernel(%arg0: i32, %arg1: i32, %arg2: memref<1x4x16x16xf32, #tpu.memory_space<vmem>>, %arg3: memref<1x1x16x16xf32, #tpu.memory_space<vmem>>, %arg4: memref<1x1x16x16xf32, #tpu.memory_space<vmem>>, %arg5: memref<16x32xf32, #tpu.memory_space<vmem>>, %arg6: memref<1x32xf32, #tpu.memory_space<vmem>>, %arg7: memref<9x32xf32, #tpu.memory_space<vmem>>, %arg8: memref<1x32xf32, #tpu.memory_space<vmem>>, %arg9: memref<1x32xf32, #tpu.memory_space<vmem>>, %arg10: memref<1x32xf32, #tpu.memory_space<vmem>>, %arg11: memref<32x16xf32, #tpu.memory_space<vmem>>, %arg12: memref<1x16xf32, #tpu.memory_space<vmem>>, %arg13: memref<1x4x16x16xf32, #tpu.memory_space<vmem>>, %arg14: memref<6x16x32xf32, #tpu.memory_space<vmem>>) attributes {dimension_semantics = [#tpu.dimension_semantics<parallel>, #tpu.dimension_semantics<parallel>], iteration_bounds = array<i64: 2, 4>, scalar_prefetch = 0 : i64, scratch_operands = 1 : i64, tpu.core_type = #tpu.core_type<tc>, window_params = [{transform_indices = @transform_0, window_bounds = array<i64: 1, 4, 16, 16>}, {transform_indices = @transform_1, window_bounds = array<i64: 1, 1, 16, 16>}, {transform_indices = @transform_2, window_bounds = array<i64: 1, 1, 16, 16>}, {pipeline_mode = #tpu.pipeline_mode<synchronous>, transform_indices = @transform_3, window_bounds = array<i64: 16, 32>}, {pipeline_mode = #tpu.pipeline_mode<synchronous>, transform_indices = @transform_4, window_bounds = array<i64: 1, 32>}, {pipeline_mode = #tpu.pipeline_mode<synchronous>, transform_indices = @transform_5, window_bounds = array<i64: 9, 32>}, {pipeline_mode = #tpu.pipeline_mode<synchronous>, transform_indices = @transform_6, window_bounds = array<i64: 1, 32>}, {pipeline_mode = #tpu.pipeline_mode<synchronous>, transform_indices = @transform_7, window_bounds = array<i64: 1, 32>}, {pipeline_mode = #tpu.pipeline_mode<synchronous>, transform_indices = @transform_8, window_bounds = array<i64: 1, 32>}, {pipeline_mode = #tpu.pipeline_mode<synchronous>, transform_indices = @transform_9, window_bounds = array<i64: 32, 16>}, {pipeline_mode = #tpu.pipeline_mode<synchronous>, transform_indices = @transform_10, window_bounds = array<i64: 1, 16>}, {transform_indices = @transform_11, window_bounds = array<i64: 1, 4, 16, 16>}]} {
    %c0 = arith.constant 0 : index
    %c0_0 = arith.constant 0 : index
    %c0_1 = arith.constant 0 : index
    %c0_2 = arith.constant 0 : index
    %0 = vector.load %arg3[%c0, %c0_0, %c0_1, %c0_2] : memref<1x1x16x16xf32, #tpu.memory_space<vmem>>, vector<1x1x16x16xf32>
    %1 = vector.shape_cast %0 : vector<1x1x16x16xf32> to vector<16x16xf32>
    %c0_3 = arith.constant 0 : index
    %c0_4 = arith.constant 0 : index
    %c0_5 = arith.constant 0 : index
    %c0_6 = arith.constant 0 : index
    %2 = vector.load %arg2[%c0_3, %c0_4, %c0_5, %c0_6] : memref<1x4x16x16xf32, #tpu.memory_space<vmem>>, vector<1x4x16x16xf32>
    %3 = vector.shape_cast %2 : vector<1x4x16x16xf32> to vector<4x16x16xf32>
    %4 = vector.shape_cast %3 : vector<4x16x16xf32> to vector<64x16xf32>
    %c0_7 = arith.constant 0 : index
    %c0_8 = arith.constant 0 : index
    %c0_9 = arith.constant 0 : index
    %c0_10 = arith.constant 0 : index
    %5 = vector.load %arg4[%c0_7, %c0_8, %c0_9, %c0_10] : memref<1x1x16x16xf32, #tpu.memory_space<vmem>>, vector<1x1x16x16xf32>
    %6 = vector.shape_cast %5 : vector<1x1x16x16xf32> to vector<16x16xf32>
    %7 = tpu.concatenate %1, %4, %6 in 0 : vector<16x16xf32>, vector<64x16xf32>, vector<16x16xf32> -> vector<96x16xf32>
    %c0_11 = arith.constant 0 : index
    %c0_12 = arith.constant 0 : index
    %8 = vector.load %arg5[%c0_11, %c0_12] : memref<16x32xf32, #tpu.memory_space<vmem>>, vector<16x32xf32>
    %cst = arith.constant dense<0.000000e+00> : vector<96x32xf32>
    %9 = tpu.matmul %7, %8, %cst {dimension_numbers = #tpu.dot_dimension_numbers<[1], [0], [0], [1], [0, 0, 1, 1], [], []>} : vector<96x16xf32>, vector<16x32xf32>, vector<96x32xf32> -> vector<96x32xf32>
    %c0_13 = arith.constant 0 : index
    %c0_14 = arith.constant 0 : index
    %10 = vector.load %arg6[%c0_13, %c0_14] : memref<1x32xf32, #tpu.memory_space<vmem>>, vector<1x32xf32>
    %11 = vector.broadcast %10 : vector<1x32xf32> to vector<96x32xf32>
    %12 = arith.addf %9, %11 : vector<96x32xf32>
    %13 = vector.shape_cast %12 : vector<96x32xf32> to vector<6x16x32xf32>
    %c0_15 = arith.constant 0 : index
    %c0_16 = arith.constant 0 : index
    %c0_17 = arith.constant 0 : index
    %14 = vector.load %arg14[%c0_15, %c0_16, %c0_17] : memref<6x16x32xf32, #tpu.memory_space<vmem>>, vector<6x16x32xf32>
    tpu.vector_store %arg14[%c0_15, %c0_16, %c0_17], %13 {strides = array<i32>} : memref<6x16x32xf32, #tpu.memory_space<vmem>>, vector<6x16x32xf32>,
    %c0_i32 = arith.constant 0 : i32
    %15 = arith.cmpi eq, %arg1, %c0_i32 : i32
    %16 = arith.extui %15 : i1 to i32
    %c0_i32_18 = arith.constant 0 : i32
    %17 = arith.cmpi ne, %16, %c0_i32_18 : i32
    scf.if %17 {
      %cst_67 = arith.constant 0.000000e+00 : f32
      %187 = vector.broadcast %cst_67 : f32 to vector<16x32xf32>
      %c0_68 = arith.constant 0 : index
      %c0_69 = arith.constant 0 : index
      %c0_70 = arith.constant 0 : index
      %188 = vector.load %arg14[%c0_68, %c0_69, %c0_70] : memref<6x16x32xf32, #tpu.memory_space<vmem>>, vector<1x16x32xf32>
      %189 = vector.shape_cast %188 : vector<1x16x32xf32> to vector<16x32xf32>
      %190 = vector.shape_cast %187 : vector<16x32xf32> to vector<1x16x32xf32>
      tpu.vector_store %arg14[%c0_68, %c0_69, %c0_70], %190 {strides = array<i32>} : memref<6x16x32xf32, #tpu.memory_space<vmem>>, vector<1x16x32xf32>,
    } else {
    }
    %c3_i32 = arith.constant 3 : i32
    %18 = arith.cmpi eq, %arg1, %c3_i32 : i32
    %19 = arith.extui %18 : i1 to i32
    %c0_i32_19 = arith.constant 0 : i32
    %20 = arith.cmpi ne, %19, %c0_i32_19 : i32
    scf.if %20 {
      %cst_67 = arith.constant 0.000000e+00 : f32
      %187 = vector.broadcast %cst_67 : f32 to vector<16x32xf32>
      %c5 = arith.constant 5 : index
      %c0_68 = arith.constant 0 : index
      %c0_69 = arith.constant 0 : index
      %188 = vector.load %arg14[%c5, %c0_68, %c0_69] : memref<6x16x32xf32, #tpu.memory_space<vmem>>, vector<1x16x32xf32>
      %189 = vector.shape_cast %188 : vector<1x16x32xf32> to vector<16x32xf32>
      %190 = vector.shape_cast %187 : vector<16x32xf32> to vector<1x16x32xf32>
      tpu.vector_store %arg14[%c5, %c0_68, %c0_69], %190 {strides = array<i32>} : memref<6x16x32xf32, #tpu.memory_space<vmem>>, vector<1x16x32xf32>,
    } else {
    }
    %c0_20 = arith.constant 0 : index
    %c0_21 = arith.constant 0 : index
    %21 = vector.load %arg7[%c0_20, %c0_21] : memref<9x32xf32, #tpu.memory_space<vmem>>, vector<9x32xf32>
    %c0_22 = arith.constant 0 : index
    %c0_23 = arith.constant 0 : index
    %22 = vector.load %arg8[%c0_22, %c0_23] : memref<1x32xf32, #tpu.memory_space<vmem>>, vector<1x32xf32>
    %c0_24 = arith.constant 0 : index
    %c0_25 = arith.constant 0 : index
    %23 = vector.load %arg9[%c0_24, %c0_25] : memref<1x32xf32, #tpu.memory_space<vmem>>, vector<1x32xf32>
    %c0_26 = arith.constant 0 : index
    %c0_27 = arith.constant 0 : index
    %24 = vector.load %arg10[%c0_26, %c0_27] : memref<1x32xf32, #tpu.memory_space<vmem>>, vector<1x32xf32>
    %c0_28 = arith.constant 0 : index
    %c0_29 = arith.constant 0 : index
    %25 = vector.load %arg11[%c0_28, %c0_29] : memref<32x16xf32, #tpu.memory_space<vmem>>, vector<32x16xf32>
    %c0_30 = arith.constant 0 : index
    %c0_31 = arith.constant 0 : index
    %26 = vector.load %arg12[%c0_30, %c0_31] : memref<1x16xf32, #tpu.memory_space<vmem>>, vector<1x16xf32>
    %27 = tpu.iota {dimensions = array<i32: 1>} : vector<1x16x32xi32>
    %c0_i32_32 = arith.constant 0 : i32
    %28 = vector.broadcast %c0_i32_32 : i32 to vector<1x16x32xi32>
    %29 = arith.cmpi sgt, %27, %28 : vector<1x16x32xi32>
    %30 = arith.extui %29 : vector<1x16x32xi1> to vector<1x16x32xi32>
    %31 = arith.sitofp %30 : vector<1x16x32xi32> to vector<1x16x32xf32>
    %c15_i32 = arith.constant 15 : i32
    %32 = vector.broadcast %c15_i32 : i32 to vector<1x16x32xi32>
    %33 = arith.cmpi slt, %27, %32 : vector<1x16x32xi32>
    %34 = arith.extui %33 : vector<1x16x32xi1> to vector<1x16x32xi32>
    %35 = arith.sitofp %34 : vector<1x16x32xi32> to vector<1x16x32xf32>
    %36 = vector.extract_strided_slice %21 {offsets = [0, 0], sizes = [1, 32], strides = [1, 1]} : vector<9x32xf32> to vector<1x32xf32>
    %37 = vector.shape_cast %36 : vector<1x32xf32> to vector<32xf32>
    %38 = vector.shape_cast %37 : vector<32xf32> to vector<1x1x32xf32>
    %39 = vector.broadcast %38 : vector<1x1x32xf32> to vector<1x16x32xf32>
    %40 = arith.mulf %39, %31 : vector<1x16x32xf32>
    %41 = vector.extract_strided_slice %21 {offsets = [3, 0], sizes = [1, 32], strides = [1, 1]} : vector<9x32xf32> to vector<1x32xf32>
    %42 = vector.shape_cast %41 : vector<1x32xf32> to vector<32xf32>
    %43 = vector.shape_cast %42 : vector<32xf32> to vector<1x1x32xf32>
    %44 = vector.broadcast %43 : vector<1x1x32xf32> to vector<1x16x32xf32>
    %45 = arith.mulf %44, %31 : vector<1x16x32xf32>
    %46 = vector.extract_strided_slice %21 {offsets = [6, 0], sizes = [1, 32], strides = [1, 1]} : vector<9x32xf32> to vector<1x32xf32>
    %47 = vector.shape_cast %46 : vector<1x32xf32> to vector<32xf32>
    %48 = vector.shape_cast %47 : vector<32xf32> to vector<1x1x32xf32>
    %49 = vector.broadcast %48 : vector<1x1x32xf32> to vector<1x16x32xf32>
    %50 = arith.mulf %49, %31 : vector<1x16x32xf32>
    %51 = vector.extract_strided_slice %21 {offsets = [2, 0], sizes = [1, 32], strides = [1, 1]} : vector<9x32xf32> to vector<1x32xf32>
    %52 = vector.shape_cast %51 : vector<1x32xf32> to vector<32xf32>
    %53 = vector.shape_cast %52 : vector<32xf32> to vector<1x1x32xf32>
    %54 = vector.broadcast %53 : vector<1x1x32xf32> to vector<1x16x32xf32>
    %55 = arith.mulf %54, %35 : vector<1x16x32xf32>
    %56 = vector.extract_strided_slice %21 {offsets = [5, 0], sizes = [1, 32], strides = [1, 1]} : vector<9x32xf32> to vector<1x32xf32>
    %57 = vector.shape_cast %56 : vector<1x32xf32> to vector<32xf32>
    %58 = vector.shape_cast %57 : vector<32xf32> to vector<1x1x32xf32>
    %59 = vector.broadcast %58 : vector<1x1x32xf32> to vector<1x16x32xf32>
    %60 = arith.mulf %59, %35 : vector<1x16x32xf32>
    %61 = vector.extract_strided_slice %21 {offsets = [8, 0], sizes = [1, 32], strides = [1, 1]} : vector<9x32xf32> to vector<1x32xf32>
    %62 = vector.shape_cast %61 : vector<1x32xf32> to vector<32xf32>
    %63 = vector.shape_cast %62 : vector<32xf32> to vector<1x1x32xf32>
    %64 = vector.broadcast %63 : vector<1x1x32xf32> to vector<1x16x32xf32>
    %65 = arith.mulf %64, %35 : vector<1x16x32xf32>
    %c0_33 = arith.constant 0 : index
    %c0_34 = arith.constant 0 : index
    %c0_35 = arith.constant 0 : index
    %66 = vector.load %arg14[%c0_33, %c0_34, %c0_35] : memref<6x16x32xf32, #tpu.memory_space<vmem>>, vector<6x16x32xf32>
    %67 = vector.extract_strided_slice %66 {offsets = [1, 0, 0], sizes = [4, 16, 32], strides = [1, 1, 1]} : vector<6x16x32xf32> to vector<4x16x32xf32>
    %68 = vector.extract_strided_slice %21 {offsets = [4, 0], sizes = [1, 32], strides = [1, 1]} : vector<9x32xf32> to vector<1x32xf32>
    %69 = vector.shape_cast %68 : vector<1x32xf32> to vector<32xf32>
    %70 = vector.shape_cast %69 : vector<32xf32> to vector<1x1x32xf32>
    %71 = vector.broadcast %70 : vector<1x1x32xf32> to vector<4x16x32xf32>
    %72 = arith.mulf %67, %71 : vector<4x16x32xf32>
    %73 = vector.shape_cast %22 : vector<1x32xf32> to vector<1x1x32xf32>
    %74 = vector.broadcast %73 : vector<1x1x32xf32> to vector<4x16x32xf32>
    %75 = arith.addf %72, %74 : vector<4x16x32xf32>
    %76 = vector.extract_strided_slice %66 {offsets = [0, 0, 0], sizes = [4, 16, 32], strides = [1, 1, 1]} : vector<6x16x32xf32> to vector<4x16x32xf32>
    %77 = vector.extract_strided_slice %21 {offsets = [1, 0], sizes = [1, 32], strides = [1, 1]} : vector<9x32xf32> to vector<1x32xf32>
    %78 = vector.shape_cast %77 : vector<1x32xf32> to vector<32xf32>
    %79 = vector.shape_cast %78 : vector<32xf32> to vector<1x1x32xf32>
    %80 = vector.broadcast %79 : vector<1x1x32xf32> to vector<4x16x32xf32>
    %81 = arith.mulf %76, %80 : vector<4x16x32xf32>
    %82 = arith.addf %75, %81 : vector<4x16x32xf32>
    %c15_i32_36 = arith.constant 15 : i32
    %83 = tpu.dynamic_rotate %76 by %c15_i32_36 dim 1 : vector<4x16x32xf32>, i32 -> vector<4x16x32xf32>
    %84 = vector.broadcast %55 : vector<1x16x32xf32> to vector<4x16x32xf32>
    %85 = arith.mulf %83, %84 : vector<4x16x32xf32>
    %86 = arith.addf %82, %85 : vector<4x16x32xf32>
    %c1_i32 = arith.constant 1 : i32
    %87 = tpu.dynamic_rotate %76 by %c1_i32 dim 1 : vector<4x16x32xf32>, i32 -> vector<4x16x32xf32>
    %88 = vector.broadcast %40 : vector<1x16x32xf32> to vector<4x16x32xf32>
    %89 = arith.mulf %87, %88 : vector<4x16x32xf32>
    %90 = arith.addf %86, %89 : vector<4x16x32xf32>
    %c15_i32_37 = arith.constant 15 : i32
    %91 = tpu.dynamic_rotate %67 by %c15_i32_37 dim 1 : vector<4x16x32xf32>, i32 -> vector<4x16x32xf32>
    %92 = vector.broadcast %60 : vector<1x16x32xf32> to vector<4x16x32xf32>
    %93 = arith.mulf %91, %92 : vector<4x16x32xf32>
    %94 = arith.addf %90, %93 : vector<4x16x32xf32>
    %c1_i32_38 = arith.constant 1 : i32
    %95 = tpu.dynamic_rotate %67 by %c1_i32_38 dim 1 : vector<4x16x32xf32>, i32 -> vector<4x16x32xf32>
    %96 = vector.broadcast %45 : vector<1x16x32xf32> to vector<4x16x32xf32>
    %97 = arith.mulf %95, %96 : vector<4x16x32xf32>
    %98 = arith.addf %94, %97 : vector<4x16x32xf32>
    %99 = vector.extract_strided_slice %66 {offsets = [2, 0, 0], sizes = [4, 16, 32], strides = [1, 1, 1]} : vector<6x16x32xf32> to vector<4x16x32xf32>
    %100 = vector.extract_strided_slice %21 {offsets = [7, 0], sizes = [1, 32], strides = [1, 1]} : vector<9x32xf32> to vector<1x32xf32>
    %101 = vector.shape_cast %100 : vector<1x32xf32> to vector<32xf32>
    %102 = vector.shape_cast %101 : vector<32xf32> to vector<1x1x32xf32>
    %103 = vector.broadcast %102 : vector<1x1x32xf32> to vector<4x16x32xf32>
    %104 = arith.mulf %99, %103 : vector<4x16x32xf32>
    %105 = arith.addf %98, %104 : vector<4x16x32xf32>
    %c15_i32_39 = arith.constant 15 : i32
    %106 = tpu.dynamic_rotate %99 by %c15_i32_39 dim 1 : vector<4x16x32xf32>, i32 -> vector<4x16x32xf32>
    %107 = vector.broadcast %65 : vector<1x16x32xf32> to vector<4x16x32xf32>
    %108 = arith.mulf %106, %107 : vector<4x16x32xf32>
    %109 = arith.addf %105, %108 : vector<4x16x32xf32>
    %c1_i32_40 = arith.constant 1 : i32
    %110 = tpu.dynamic_rotate %99 by %c1_i32_40 dim 1 : vector<4x16x32xf32>, i32 -> vector<4x16x32xf32>
    %111 = vector.broadcast %50 : vector<1x16x32xf32> to vector<4x16x32xf32>
    %112 = arith.mulf %110, %111 : vector<4x16x32xf32>
    %113 = arith.addf %109, %112 : vector<4x16x32xf32>
    %114 = arith.addf %113, %67 : vector<4x16x32xf32>
    %115 = vector.shape_cast %114 : vector<4x16x32xf32> to vector<64x32xf32>
    %cst_41 = arith.constant dense<0.000000e+00> : vector<64xf32>
    %116 = vector.multi_reduction <add>, %115, %cst_41 [1] : vector<64x32xf32> to vector<64xf32>
    %117 = vector.shape_cast %116 : vector<64xf32> to vector<64x1xf32>
    %cst_42 = arith.constant 3.200000e+01 : f32
    %118 = vector.broadcast %cst_42 : f32 to vector<64x1xf32>
    %119 = arith.divf %117, %118 : vector<64x1xf32>
    %120 = vector.broadcast %119 : vector<64x1xf32> to vector<64x32xf32>
    %121 = arith.subf %115, %120 : vector<64x32xf32>
    %122 = arith.mulf %121, %121 : vector<64x32xf32>
    %cst_43 = arith.constant dense<0.000000e+00> : vector<64xf32>
    %123 = vector.multi_reduction <add>, %122, %cst_43 [1] : vector<64x32xf32> to vector<64xf32>
    %124 = vector.shape_cast %123 : vector<64xf32> to vector<64x1xf32>
    %cst_44 = arith.constant 3.200000e+01 : f32
    %125 = vector.broadcast %cst_44 : f32 to vector<64x1xf32>
    %126 = arith.divf %124, %125 : vector<64x1xf32>
    %cst_45 = arith.constant 9.99999974E-6 : f32
    %127 = vector.broadcast %cst_45 : f32 to vector<64x1xf32>
    %128 = arith.addf %126, %127 : vector<64x1xf32>
    %129 = math.rsqrt %128 : vector<64x1xf32>
    %130 = vector.broadcast %129 : vector<64x1xf32> to vector<64x32xf32>
    %131 = arith.mulf %121, %130 : vector<64x32xf32>
    %132 = vector.broadcast %23 : vector<1x32xf32> to vector<64x32xf32>
    %133 = arith.mulf %131, %132 : vector<64x32xf32>
    %134 = vector.broadcast %24 : vector<1x32xf32> to vector<64x32xf32>
    %135 = arith.addf %133, %134 : vector<64x32xf32>
    %cst_46 = arith.constant 5.000000e-01 : f32
    %136 = vector.broadcast %cst_46 : f32 to vector<64x32xf32>
    %137 = arith.mulf %136, %135 : vector<64x32xf32>
    %cst_47 = arith.constant 0.707106769 : f32
    %138 = vector.broadcast %cst_47 : f32 to vector<64x32xf32>
    %139 = arith.mulf %135, %138 : vector<64x32xf32>
    %cst_48 = arith.constant 0.000000e+00 : f32
    %140 = vector.broadcast %cst_48 : f32 to vector<64x32xf32>
    %141 = arith.cmpf oge, %139, %140 : vector<64x32xf32>
    %cst_49 = arith.constant 1.000000e+00 : f32
    %cst_50 = arith.constant -1.000000e+00 : f32
    %142 = vector.broadcast %cst_49 : f32 to vector<64x32xf32>
    %143 = vector.broadcast %cst_50 : f32 to vector<64x32xf32>
    %144 = arith.select %141, %142, %143 : vector<64x32xi1>, vector<64x32xf32>
    %145 = math.absf %139 : vector<64x32xf32>
    %cst_51 = arith.constant 0.327591091 : f32
    %146 = vector.broadcast %cst_51 : f32 to vector<64x32xf32>
    %147 = arith.mulf %146, %145 : vector<64x32xf32>
    %cst_52 = arith.constant 1.000000e+00 : f32
    %148 = vector.broadcast %cst_52 : f32 to vector<64x32xf32>
    %149 = arith.addf %148, %147 : vector<64x32xf32>
    %150 = tpu.reciprocal %149 {approx = true} : vector<64x32xf32> -> vector<64x32xf32>
    %151 = arith.mulf %149, %150 : vector<64x32xf32>
    %cst_53 = arith.constant 2.000000e+00 : f32
    %152 = vector.broadcast %cst_53 : f32 to vector<64x32xf32>
    %153 = arith.subf %152, %151 : vector<64x32xf32>
    %154 = arith.mulf %150, %153 : vector<64x32xf32>
    %cst_54 = arith.constant 1.06140542 : f32
    %155 = vector.broadcast %cst_54 : f32 to vector<64x32xf32>
    %156 = arith.mulf %155, %154 : vector<64x32xf32>
    %cst_55 = arith.constant -1.45315206 : f32
    %157 = vector.broadcast %cst_55 : f32 to vector<64x32xf32>
    %158 = arith.addf %156, %157 : vector<64x32xf32>
    %159 = arith.mulf %158, %154 : vector<64x32xf32>
    %cst_56 = arith.constant 1.42141378 : f32
    %160 = vector.broadcast %cst_56 : f32 to vector<64x32xf32>
    %161 = arith.addf %159, %160 : vector<64x32xf32>
    %162 = arith.mulf %161, %154 : vector<64x32xf32>
    %cst_57 = arith.constant -0.284496725 : f32
    %163 = vector.broadcast %cst_57 : f32 to vector<64x32xf32>
    %164 = arith.addf %162, %163 : vector<64x32xf32>
    %165 = arith.mulf %164, %154 : vector<64x32xf32>
    %cst_58 = arith.constant 0.254829586 : f32
    %166 = vector.broadcast %cst_58 : f32 to vector<64x32xf32>
    %167 = arith.addf %165, %166 : vector<64x32xf32>
    %168 = arith.mulf %167, %154 : vector<64x32xf32>
    %cst_59 = arith.constant 0.000000e+00 : f32
    %169 = vector.broadcast %cst_59 : f32 to vector<64x32xf32>
    %170 = arith.subf %169, %145 : vector<64x32xf32>
    %171 = arith.mulf %170, %145 : vector<64x32xf32>
    %172 = math.exp %171 : vector<64x32xf32>
    %173 = arith.mulf %168, %172 : vector<64x32xf32>
    %cst_60 = arith.constant 1.000000e+00 : f32
    %174 = vector.broadcast %cst_60 : f32 to vector<64x32xf32>
    %175 = arith.subf %174, %173 : vector<64x32xf32>
    %176 = arith.mulf %144, %175 : vector<64x32xf32>
    %cst_61 = arith.constant 1.000000e+00 : f32
    %177 = vector.broadcast %cst_61 : f32 to vector<64x32xf32>
    %178 = arith.addf %177, %176 : vector<64x32xf32>
    %179 = arith.mulf %137, %178 : vector<64x32xf32>
    %cst_62 = arith.constant dense<0.000000e+00> : vector<64x16xf32>
    %180 = tpu.matmul %179, %25, %cst_62 {dimension_numbers = #tpu.dot_dimension_numbers<[1], [0], [0], [1], [0, 0, 1, 1], [], []>} : vector<64x32xf32>, vector<32x16xf32>, vector<64x16xf32> -> vector<64x16xf32>
    %181 = vector.broadcast %26 : vector<1x16xf32> to vector<64x16xf32>
    %182 = arith.addf %180, %181 : vector<64x16xf32>
    %183 = vector.shape_cast %182 : vector<64x16xf32> to vector<4x16x16xf32>
    %c0_63 = arith.constant 0 : index
    %c0_64 = arith.constant 0 : index
    %c0_65 = arith.constant 0 : index
    %c0_66 = arith.constant 0 : index
    %184 = vector.load %arg13[%c0_63, %c0_64, %c0_65, %c0_66] : memref<1x4x16x16xf32, #tpu.memory_space<vmem>>, vector<1x4x16x16xf32>
    %185 = vector.shape_cast %184 : vector<1x4x16x16xf32> to vector<4x16x16xf32>
    %186 = vector.shape_cast %183 : vector<4x16x16xf32> to vector<1x4x16x16xf32>
    tpu.vector_store %arg13[%c0_63, %c0_64, %c0_65, %c0_66], %186 {strides = array<i32>} : memref<1x4x16x16xf32, #tpu.memory_space<vmem>>, vector<1x4x16x16xf32>,
    return
  }
  func.func @transform_0(%arg0: i32, %arg1: i32) -> (i32, i32, i32, i32) {
    %c0_i32 = arith.constant 0 : i32
    %c0_i32_0 = arith.constant 0 : i32
    %c0_i32_1 = arith.constant 0 : i32
    return %arg0, %arg1, %c0_i32, %c0_i32_0 : i32, i32, i32, i32
  }
  func.func @transform_1(%arg0: i32, %arg1: i32) -> (i32, i32, i32, i32) {
    %c4_i32 = arith.constant 4 : i32
    %0 = arith.muli %arg1, %c4_i32 : i32
    %c1_i32 = arith.constant 1 : i32
    %1 = arith.subi %0, %c1_i32 : i32
    %c0_i32 = arith.constant 0 : i32
    %2 = arith.maxsi %1, %c0_i32 : i32
    %c0_i32_0 = arith.constant 0 : i32
    %c0_i32_1 = arith.constant 0 : i32
    %c0_i32_2 = arith.constant 0 : i32
    return %arg0, %2, %c0_i32_0, %c0_i32_1 : i32, i32, i32, i32
  }
  func.func @transform_2(%arg0: i32, %arg1: i32) -> (i32, i32, i32, i32) {
    %c1_i32 = arith.constant 1 : i32
    %0 = arith.addi %arg1, %c1_i32 : i32
    %c4_i32 = arith.constant 4 : i32
    %1 = arith.muli %0, %c4_i32 : i32
    %c15_i32 = arith.constant 15 : i32
    %2 = arith.minsi %1, %c15_i32 : i32
    %c0_i32 = arith.constant 0 : i32
    %c0_i32_0 = arith.constant 0 : i32
    %c0_i32_1 = arith.constant 0 : i32
    return %arg0, %2, %c0_i32, %c0_i32_0 : i32, i32, i32, i32
  }
  func.func @transform_3(%arg0: i32, %arg1: i32) -> (i32, i32) {
    %c0_i32 = arith.constant 0 : i32
    %c0_i32_0 = arith.constant 0 : i32
    %c0_i32_1 = arith.constant 0 : i32
    return %c0_i32, %c0_i32_0 : i32, i32
  }
  func.func @transform_4(%arg0: i32, %arg1: i32) -> (i32, i32) {
    %c0_i32 = arith.constant 0 : i32
    %c0_i32_0 = arith.constant 0 : i32
    %c0_i32_1 = arith.constant 0 : i32
    return %c0_i32, %c0_i32_0 : i32, i32
  }
  func.func @transform_5(%arg0: i32, %arg1: i32) -> (i32, i32) {
    %c0_i32 = arith.constant 0 : i32
    %c0_i32_0 = arith.constant 0 : i32
    %c0_i32_1 = arith.constant 0 : i32
    return %c0_i32, %c0_i32_0 : i32, i32
  }
  func.func @transform_6(%arg0: i32, %arg1: i32) -> (i32, i32) {
    %c0_i32 = arith.constant 0 : i32
    %c0_i32_0 = arith.constant 0 : i32
    %c0_i32_1 = arith.constant 0 : i32
    return %c0_i32, %c0_i32_0 : i32, i32
  }
  func.func @transform_7(%arg0: i32, %arg1: i32) -> (i32, i32) {
    %c0_i32 = arith.constant 0 : i32
    %c0_i32_0 = arith.constant 0 : i32
    %c0_i32_1 = arith.constant 0 : i32
    return %c0_i32, %c0_i32_0 : i32, i32
  }
  func.func @transform_8(%arg0: i32, %arg1: i32) -> (i32, i32) {
    %c0_i32 = arith.constant 0 : i32
    %c0_i32_0 = arith.constant 0 : i32
    %c0_i32_1 = arith.constant 0 : i32
    return %c0_i32, %c0_i32_0 : i32, i32
  }
  func.func @transform_9(%arg0: i32, %arg1: i32) -> (i32, i32) {
    %c0_i32 = arith.constant 0 : i32
    %c0_i32_0 = arith.constant 0 : i32
    %c0_i32_1 = arith.constant 0 : i32
    return %c0_i32, %c0_i32_0 : i32, i32
  }
  func.func @transform_10(%arg0: i32, %arg1: i32) -> (i32, i32) {
    %c0_i32 = arith.constant 0 : i32
    %c0_i32_0 = arith.constant 0 : i32
    %c0_i32_1 = arith.constant 0 : i32
    return %c0_i32, %c0_i32_0 : i32, i32
  }
  func.func @transform_11(%arg0: i32, %arg1: i32) -> (i32, i32, i32, i32) {
    %c0_i32 = arith.constant 0 : i32
    %c0_i32_0 = arith.constant 0 : i32
    %c0_i32_1 = arith.constant 0 : i32
    return %arg0, %arg1, %c0_i32, %c0_i32_0 : i32, i32, i32, i32
  }
}

</mosaic_0001>

<llo_original>
// kernel: tpu_custom_call.1
$region0: #{tpu_custom_call.1}
  #allocation0 [shape = 'u32[]', space=smem, size = 0x4, offset = 0x4, fixed_abs, tag = 'smem constant byte address 0x4 - core index']
  #allocation1 [shape = 'u32[72,128]{1,0:T(1,128)}', space=vmem, size = 0x9000, scoped, tag = 'internal scratch']
  #allocation2 [shape = 'f32[6,16,32]{2,1,0:T(8,128)}', space=vmem, size = 0xc000, scoped, tag = 'scratch operand']
  %s0 = inlined_call_operand.hbm [shape: f32[2,16,16,16], index: 0, kind: input, shape index: {}]
  %s1 = inlined_call_operand.hbm [shape: f32[2,16,16,16], index: 1, kind: input, shape index: {}]
  %s2 = inlined_call_operand.hbm [shape: f32[2,16,16,16], index: 2, kind: input, shape index: {}]
  %s3 = inlined_call_operand.vmem [shape: f32[16,32], index: 3, kind: input, shape index: {}]
  %s4 = inlined_call_operand.vmem [shape: f32[1,32], index: 4, kind: input, shape index: {}]
  %s5 = inlined_call_operand.vmem [shape: f32[9,32], index: 5, kind: input, shape index: {}]
  %s6 = inlined_call_operand.vmem [shape: f32[1,32], index: 6, kind: input, shape index: {}]
  %s7 = inlined_call_operand.vmem [shape: f32[1,32], index: 7, kind: input, shape index: {}]
  %s8 = inlined_call_operand.vmem [shape: f32[1,32], index: 8, kind: input, shape index: {}]
  %s9 = inlined_call_operand.vmem [shape: f32[32,16], index: 9, kind: input, shape index: {}]
  %s10 = inlined_call_operand.vmem [shape: f32[1,16], index: 10, kind: input, shape index: {}]
  %s11 = inlined_call_operand.hbm [shape: f32[2,16,16,16], index: 11, kind: output, shape index: {}]
  %s12 = sld [smem:[#allocation0]]
  $region97: #{tpu_custom_call.1} parent=0
    _
  %s14 = ssub.s32 1, %s12
  %s15 = scalar_select 0, %s14, %s12
  $region1: #{tpu_custom_call.1} parent=0
    #allocation3 [shape = 'u8[65536]{0}', space=vmem, size = 0x10000, scoped, tag = 'input window, operand 0']
    #allocation4 [shape = 's32[2]{0}', space=sflag, size = 0x8, scoped, tag = 'scoped memory for tpu_custom_call.1']
    #allocation5 [shape = 's32[2]{0}', space=sflag, size = 0x8, scoped, tag = 'scoped memory for tpu_custom_call.1']
    #allocation6 [shape = 'u8[16384]{0}', space=vmem, size = 0x4000, scoped, tag = 'input window, operand 1']
    #allocation7 [shape = 's32[2]{0}', space=sflag, size = 0x8, scoped, tag = 'scoped memory for tpu_custom_call.1']
    #allocation8 [shape = 'u8[16384]{0}', space=vmem, size = 0x4000, scoped, tag = 'input window, operand 2']
    #allocation9 [shape = 'u8[65536]{0}', space=vmem, size = 0x10000, scoped, tag = 'output window, operand 0']
    %16 = vsyncpa [#allocation4], 0
    %s17 = scalar_lea.sflag [#allocation4], 1
    %18 = vsyncpa %s17, 0
    %19 = vsyncpa [#allocation7], 0
    %s20 = scalar_lea.sflag [#allocation7], 1
    %21 = vsyncpa %s20, 0
    %22 = vsyncpa [#allocation5], 0
    %s23 = scalar_lea.sflag [#allocation5], 1
    %24 = vsyncpa %s23, 0
    loop: start=0, step=1, limit=10
    $region2: #{tpu_custom_call.1} parent=1 // loop_pre_header
      _
    $region3: #{tpu_custom_call.1} parent=1 // loop_header
      %s26 = sphi 0, %s30
      %p27 = scmp.ge.s32.totalorder %s26, 10
      %s33 = sphi 0, %s45
      %s34 = sphi 0, %s41
      %s35 = sphi 0, %s33
      %s36 = sphi 0, %s34
      %s37 = sphi 0, %s35
      %s38 = sphi 0, %s36
      %s50 = sphi 0, %s52
      %s53 = sphi 0, %s50
      %s54 = sphi 0, %s53
      %s70 = sphi 0, %s54
      %s86 = sphi 0, %s88
      %s89 = sphi 0, %s86
      %s90 = sphi 0, %s89
      %s106 = sphi 0, %s90
      %s122 = sphi 0, %s124
      %s125 = sphi 0, %s122
      %s126 = sphi 0, %s125
      %s142 = sphi 0, %s126
      %s146 = sphi 0, %s146
      %s148 = sphi 0, %s146
      %s149 = sphi 0, %s148
      %s163 = sphi 0, %s149
      %s167 = sphi 0, %s167
      %s169 = sphi 0, %s167
      %s170 = sphi 0, %s169
      %s184 = sphi 0, %s170
      %s188 = sphi 0, %s188
      %s190 = sphi 0, %s188
      %s191 = sphi 0, %s190
      %s205 = sphi 0, %s191
      %s209 = sphi 0, %s209
      %s211 = sphi 0, %s209
      %s212 = sphi 0, %s211
      %s226 = sphi 0, %s212
      %s230 = sphi 0, %s230
      %s232 = sphi 0, %s230
      %s233 = sphi 0, %s232
      %s247 = sphi 0, %s233
      %s251 = sphi 0, %s251
      %s253 = sphi 0, %s251
      %s254 = sphi 0, %s253
      %s268 = sphi 0, %s254
      %s272 = sphi 0, %s272
      %s274 = sphi 0, %s272
      %s275 = sphi 0, %s274
      %s289 = sphi 0, %s275
      %s293 = sphi 0, %s293
      %s295 = sphi 0, %s293
      %s296 = sphi 0, %s295
      %s310 = sphi 0, %s296
      %s318 = sphi 0, %s320
      %s321 = sphi 0, %s318
      %s322 = sphi 0, %s321
      %s338 = sphi 0, %s322
    $region4: #{tpu_custom_call.1} parent=1 // loop_header_branch
      %29 = sbr.rel (%p27) target = $region8
    $region5: #{tpu_custom_call.1} parent=1 // loop_body
      %s31 = ssub.s32 %s26, 1
      %s32 = ssub.s32 %s26, 2
      %s39 = sadd.s32 1, %s34
      %p40 = scmp.ge.s32.totalorder %s39, 4
      %s41 = scalar_select %p40, 0, %s39
      %s42 = sadd.s32 1, %s33
      %s43 = scalar_select %p40, %s42, %s33
      %p44 = scmp.ge.s32.totalorder %s43, 2
      %s45 = scalar_select %p44, 0, %s43
      %s46 = ssub.s32 %s33, %s45
      %s47 = ssub.s32 %s34, %s41
      %s48 = sor.u32 %s46, %s47
      %p49 = scmp.eq.s32.totalorder %s48, 0
      %s51 = sadd.s32 %s50, 1
      %s52 = scalar_select %p49, %s50, %s51
      %p55 = pneg %p49
      %p56 = scmp.eq.s32.totalorder %s26, 7
      %p57 = por %p55, %p56
      %p58 = scmp.ne.s32.totalorder %s50, %s53
      %p59 = scmp.eq.s32.totalorder %s26, 0
      %p60 = por %p58, %p59
      %p61 = scmp.ne.s32.totalorder %s50, %s53
      %p62 = scmp.eq.s32.totalorder %s31, 7
      %p63 = por %p61, %p62
      %p64 = scmp.ne.s32.totalorder %s53, %s54
      %p65 = scmp.eq.s32.totalorder %s31, 0
      %p66 = por %p64, %p65
      %p67 = scmp.ne.s32.totalorder %s53, %s54
      %p68 = scmp.eq.s32.totalorder %s32, 7
      %p69 = por %p67, %p68
      %p71 = scmp.ne.s32.totalorder %s54, %s70
      %p72 = scmp.eq.s32.totalorder %s32, 0
      %p73 = por %p71, %p72
      %s74 = smul.u32 %s34, 4
      %s75 = ssub.s32 %s74, 1
      %p76 = scmp.gt.s32.totalorder %s75, 0
      %s77 = scalar_select %p76, %s75, 0
      %s78 = smul.u32 %s41, 4
      %s79 = ssub.s32 %s78, 1
      %p80 = scmp.gt.s32.totalorder %s79, 0
      %s81 = scalar_select %p80, %s79, 0
      %s82 = ssub.s32 %s33, %s45
      %s83 = ssub.s32 %s77, %s81
      %s84 = sor.u32 %s82, %s83
      %p85 = scmp.eq.s32.totalorder %s84, 0
      %s87 = sadd.s32 %s86, 1
      %s88 = scalar_select %p85, %s86, %s87
      %p91 = pneg %p85
      %p92 = scmp.eq.s32.totalorder %s26, 7
      %p93 = por %p91, %p92
      %p94 = scmp.ne.s32.totalorder %s86, %s89
      %p95 = scmp.eq.s32.totalorder %s26, 0
      %p96 = por %p94, %p95
      %p97 = scmp.ne.s32.totalorder %s86, %s89
      %p98 = scmp.eq.s32.totalorder %s31, 7
      %p99 = por %p97, %p98
      %p100 = scmp.ne.s32.totalorder %s89, %s90
      %p101 = scmp.eq.s32.totalorder %s31, 0
      %p102 = por %p100, %p101
      %p103 = scmp.ne.s32.totalorder %s89, %s90
      %p104 = scmp.eq.s32.totalorder %s32, 7
      %p105 = por %p103, %p104
      %p107 = scmp.ne.s32.totalorder %s90, %s106
      %p108 = scmp.eq.s32.totalorder %s32, 0
      %p109 = por %p107, %p108
      %s110 = sadd.s32 %s34, 1
      %s111 = smul.u32 %s110, 4
      %p112 = scmp.lt.s32.totalorder %s111, 15
      %s113 = scalar_select %p112, %s111, 15
      %s114 = sadd.s32 %s41, 1
      %s115 = smul.u32 %s114, 4
      %p116 = scmp.lt.s32.totalorder %s115, 15
      %s117 = scalar_select %p116, %s115, 15
      %s118 = ssub.s32 %s33, %s45
      %s119 = ssub.s32 %s113, %s117
      %s120 = sor.u32 %s118, %s119
      %p121 = scmp.eq.s32.totalorder %s120, 0
      %s123 = sadd.s32 %s122, 1
      %s124 = scalar_select %p121, %s122, %s123
      %p127 = pneg %p121
      %p128 = scmp.eq.s32.totalorder %s26, 7
      %p129 = por %p127, %p128
      %p130 = scmp.ne.s32.totalorder %s122, %s125
      %p131 = scmp.eq.s32.totalorder %s26, 0
      %p132 = por %p130, %p131
      %p133 = scmp.ne.s32.totalorder %s122, %s125
      %p134 = scmp.eq.s32.totalorder %s31, 7
      %p135 = por %p133, %p134
      %p136 = scmp.ne.s32.totalorder %s125, %s126
      %p137 = scmp.eq.s32.totalorder %s31, 0
      %p138 = por %p136, %p137
      %p139 = scmp.ne.s32.totalorder %s125, %s126
      %p140 = scmp.eq.s32.totalorder %s32, 7
      %p141 = por %p139, %p140
      %p143 = scmp.ne.s32.totalorder %s126, %s142
      %p144 = scmp.eq.s32.totalorder %s32, 0
      %p145 = por %p143, %p144
      %s147 = sadd.s32 %s146, 1
      %p150 = scmp.eq.s32.totalorder %s26, 7
      %p151 = scmp.ne.s32.totalorder %s146, %s148
      %p152 = scmp.eq.s32.totalorder %s26, 0
      %p153 = por %p151, %p152
      %p154 = scmp.ne.s32.totalorder %s146, %s148
      %p155 = scmp.eq.s32.totalorder %s31, 7
      %p156 = por %p154, %p155
      %p157 = scmp.ne.s32.totalorder %s148, %s149
      %p158 = scmp.eq.s32.totalorder %s31, 0
      %p159 = por %p157, %p158
      %p160 = scmp.ne.s32.totalorder %s148, %s149
      %p161 = scmp.eq.s32.totalorder %s32, 7
      %p162 = por %p160, %p161
      %p164 = scmp.ne.s32.totalorder %s149, %s163
      %p165 = scmp.eq.s32.totalorder %s32, 0
      %p166 = por %p164, %p165
      %s168 = sadd.s32 %s167, 1
      %p171 = scmp.eq.s32.totalorder %s26, 7
      %p172 = scmp.ne.s32.totalorder %s167, %s169
      %p173 = scmp.eq.s32.totalorder %s26, 0
      %p174 = por %p172, %p173
      %p175 = scmp.ne.s32.totalorder %s167, %s169
      %p176 = scmp.eq.s32.totalorder %s31, 7
      %p177 = por %p175, %p176
      %p178 = scmp.ne.s32.totalorder %s169, %s170
      %p179 = scmp.eq.s32.totalorder %s31, 0
      %p180 = por %p178, %p179
      %p181 = scmp.ne.s32.totalorder %s169, %s170
      %p182 = scmp.eq.s32.totalorder %s32, 7
      %p183 = por %p181, %p182
      %p185 = scmp.ne.s32.totalorder %s170, %s184
      %p186 = scmp.eq.s32.totalorder %s32, 0
      %p187 = por %p185, %p186
      %s189 = sadd.s32 %s188, 1
      %p192 = scmp.eq.s32.totalorder %s26, 7
      %p193 = scmp.ne.s32.totalorder %s188, %s190
      %p194 = scmp.eq.s32.totalorder %s26, 0
      %p195 = por %p193, %p194
      %p196 = scmp.ne.s32.totalorder %s188, %s190
      %p197 = scmp.eq.s32.totalorder %s31, 7
      %p198 = por %p196, %p197
      %p199 = scmp.ne.s32.totalorder %s190, %s191
      %p200 = scmp.eq.s32.totalorder %s31, 0
      %p201 = por %p199, %p200
      %p202 = scmp.ne.s32.totalorder %s190, %s191
      %p203 = scmp.eq.s32.totalorder %s32, 7
      %p204 = por %p202, %p203
      %p206 = scmp.ne.s32.totalorder %s191, %s205
      %p207 = scmp.eq.s32.totalorder %s32, 0
      %p208 = por %p206, %p207
      %s210 = sadd.s32 %s209, 1
      %p213 = scmp.eq.s32.totalorder %s26, 7
      %p214 = scmp.ne.s32.totalorder %s209, %s211
      %p215 = scmp.eq.s32.totalorder %s26, 0
      %p216 = por %p214, %p215
      %p217 = scmp.ne.s32.totalorder %s209, %s211
      %p218 = scmp.eq.s32.totalorder %s31, 7
      %p219 = por %p217, %p218
      %p220 = scmp.ne.s32.totalorder %s211, %s212
      %p221 = scmp.eq.s32.totalorder %s31, 0
      %p222 = por %p220, %p221
      %p223 = scmp.ne.s32.totalorder %s211, %s212
      %p224 = scmp.eq.s32.totalorder %s32, 7
      %p225 = por %p223, %p224
      %p227 = scmp.ne.s32.totalorder %s212, %s226
      %p228 = scmp.eq.s32.totalorder %s32, 0
      %p229 = por %p227, %p228
      %s231 = sadd.s32 %s230, 1
      %p234 = scmp.eq.s32.totalorder %s26, 7
      %p235 = scmp.ne.s32.totalorder %s230, %s232
      %p236 = scmp.eq.s32.totalorder %s26, 0
      %p237 = por %p235, %p236
      %p238 = scmp.ne.s32.totalorder %s230, %s232
      %p239 = scmp.eq.s32.totalorder %s31, 7
      %p240 = por %p238, %p239
      %p241 = scmp.ne.s32.totalorder %s232, %s233
      %p242 = scmp.eq.s32.totalorder %s31, 0
      %p243 = por %p241, %p242
      %p244 = scmp.ne.s32.totalorder %s232, %s233
      %p245 = scmp.eq.s32.totalorder %s32, 7
      %p246 = por %p244, %p245
      %p248 = scmp.ne.s32.totalorder %s233, %s247
      %p249 = scmp.eq.s32.totalorder %s32, 0
      %p250 = por %p248, %p249
      %s252 = sadd.s32 %s251, 1
      %p255 = scmp.eq.s32.totalorder %s26, 7
      %p256 = scmp.ne.s32.totalorder %s251, %s253
      %p257 = scmp.eq.s32.totalorder %s26, 0
      %p258 = por %p256, %p257
      %p259 = scmp.ne.s32.totalorder %s251, %s253
      %p260 = scmp.eq.s32.totalorder %s31, 7
      %p261 = por %p259, %p260
      %p262 = scmp.ne.s32.totalorder %s253, %s254
      %p263 = scmp.eq.s32.totalorder %s31, 0
      %p264 = por %p262, %p263
      %p265 = scmp.ne.s32.totalorder %s253, %s254
      %p266 = scmp.eq.s32.totalorder %s32, 7
      %p267 = por %p265, %p266
      %p269 = scmp.ne.s32.totalorder %s254, %s268
      %p270 = scmp.eq.s32.totalorder %s32, 0
      %p271 = por %p269, %p270
      %s273 = sadd.s32 %s272, 1
      %p276 = scmp.eq.s32.totalorder %s26, 7
      %p277 = scmp.ne.s32.totalorder %s272, %s274
      %p278 = scmp.eq.s32.totalorder %s26, 0
      %p279 = por %p277, %p278
      %p280 = scmp.ne.s32.totalorder %s272, %s274
      %p281 = scmp.eq.s32.totalorder %s31, 7
      %p282 = por %p280, %p281
      %p283 = scmp.ne.s32.totalorder %s274, %s275
      %p284 = scmp.eq.s32.totalorder %s31, 0
      %p285 = por %p283, %p284
      %p286 = scmp.ne.s32.totalorder %s274, %s275
      %p287 = scmp.eq.s32.totalorder %s32, 7
      %p288 = por %p286, %p287
      %p290 = scmp.ne.s32.totalorder %s275, %s289
      %p291 = scmp.eq.s32.totalorder %s32, 0
      %p292 = por %p290, %p291
      %s294 = sadd.s32 %s293, 1
      %p297 = scmp.eq.s32.totalorder %s26, 7
      %p298 = scmp.ne.s32.totalorder %s293, %s295
      %p299 = scmp.eq.s32.totalorder %s26, 0
      %p300 = por %p298, %p299
      %p301 = scmp.ne.s32.totalorder %s293, %s295
      %p302 = scmp.eq.s32.totalorder %s31, 7
      %p303 = por %p301, %p302
      %p304 = scmp.ne.s32.totalorder %s295, %s296
      %p305 = scmp.eq.s32.totalorder %s31, 0
      %p306 = por %p304, %p305
      %p307 = scmp.ne.s32.totalorder %s295, %s296
      %p308 = scmp.eq.s32.totalorder %s32, 7
      %p309 = por %p307, %p308
      %p311 = scmp.ne.s32.totalorder %s296, %s310
      %p312 = scmp.eq.s32.totalorder %s32, 0
      %p313 = por %p311, %p312
      %s314 = ssub.s32 %s33, %s45
      %s315 = ssub.s32 %s34, %s41
      %s316 = sor.u32 %s314, %s315
      %p317 = scmp.eq.s32.totalorder %s316, 0
      %s319 = sadd.s32 %s318, 1
      %s320 = scalar_select %p317, %s318, %s319
      %p323 = pneg %p317
      %p324 = scmp.eq.s32.totalorder %s26, 7
      %p325 = por %p323, %p324
      %p326 = scmp.ne.s32.totalorder %s318, %s321
      %p327 = scmp.eq.s32.totalorder %s26, 0
      %p328 = por %p326, %p327
      %p329 = scmp.ne.s32.totalorder %s318, %s321
      %p330 = scmp.eq.s32.totalorder %s31, 7
      %p331 = por %p329, %p330
      %p332 = scmp.ne.s32.totalorder %s321, %s322
      %p333 = scmp.eq.s32.totalorder %s31, 0
      %p334 = por %p332, %p333
      %p335 = scmp.ne.s32.totalorder %s321, %s322
      %p336 = scmp.eq.s32.totalorder %s32, 7
      %p337 = por %p335, %p336
      %p339 = scmp.ne.s32.totalorder %s322, %s338
      %p340 = scmp.eq.s32.totalorder %s32, 0
      %p341 = por %p339, %p340
      %p342 = scmp.le.s32.totalorder 1, %s26
      %p343 = scmp.lt.s32.totalorder %s26, 9
      %p344 = pnand %p342, %p343
      %p345 = pneg %p344
      // Predicated region
      $region9: #{tpu_custom_call.1} parent=5 // pred_check
        _
      $region10: #{tpu_custom_call.1} parent=5 // pred_check_branch
        %347 = sbr.rel (%p344) target = $region12
      $region11: #{tpu_custom_call.1} parent=5 // pred_region
        %s348 = ssub.s32 %s26, 1
        // Predicated region
        $region13: #{tpu_custom_call.1} parent=11 // pred_check
          %p349 = pneg %p159
        $region14: #{tpu_custom_call.1} parent=11 // pred_check_branch
          %351 = sbr.rel (%p349) target = $region16
        $region15: #{tpu_custom_call.1} parent=11 // pred_region
          _
        $region16: #{tpu_custom_call.1} parent=11 // pred_fallthru
          _
        // Predicated region
        $region17: #{tpu_custom_call.1} parent=11 // pred_check
          %p352 = pneg %p180
        $region18: #{tpu_custom_call.1} parent=11 // pred_check_branch
          %354 = sbr.rel (%p352) target = $region20
        $region19: #{tpu_custom_call.1} parent=11 // pred_region
          _
        $region20: #{tpu_custom_call.1} parent=11 // pred_fallthru
          _
        // Predicated region
        $region21: #{tpu_custom_call.1} parent=11 // pred_check
          %p355 = pneg %p201
        $region22: #{tpu_custom_call.1} parent=11 // pred_check_branch
          %357 = sbr.rel (%p355) target = $region24
        $region23: #{tpu_custom_call.1} parent=11 // pred_region
          _
        $region24: #{tpu_custom_call.1} parent=11 // pred_fallthru
          _
        // Predicated region
        $region25: #{tpu_custom_call.1} parent=11 // pred_check
          %p358 = pneg %p222
        $region26: #{tpu_custom_call.1} parent=11 // pred_check_branch
          %360 = sbr.rel (%p358) target = $region28
        $region27: #{tpu_custom_call.1} parent=11 // pred_region
          _
        $region28: #{tpu_custom_call.1} parent=11 // pred_fallthru
          _
        // Predicated region
        $region29: #{tpu_custom_call.1} parent=11 // pred_check
          %p361 = pneg %p243
        $region30: #{tpu_custom_call.1} parent=11 // pred_check_branch
          %363 = sbr.rel (%p361) target = $region32
        $region31: #{tpu_custom_call.1} parent=11 // pred_region
          _
        $region32: #{tpu_custom_call.1} parent=11 // pred_fallthru
          _
        // Predicated region
        $region33: #{tpu_custom_call.1} parent=11 // pred_check
          %p364 = pneg %p264
        $region34: #{tpu_custom_call.1} parent=11 // pred_check_branch
          %366 = sbr.rel (%p364) target = $region36
        $region35: #{tpu_custom_call.1} parent=11 // pred_region
          _
        $region36: #{tpu_custom_call.1} parent=11 // pred_fallthru
          _
        // Predicated region
        $region37: #{tpu_custom_call.1} parent=11 // pred_check
          %p367 = pneg %p285
        $region38: #{tpu_custom_call.1} parent=11 // pred_check_branch
          %369 = sbr.rel (%p367) target = $region40
        $region39: #{tpu_custom_call.1} parent=11 // pred_region
          _
        $region40: #{tpu_custom_call.1} parent=11 // pred_fallthru
          _
        // Predicated region
        $region41: #{tpu_custom_call.1} parent=11 // pred_check
          %p370 = pneg %p306
        $region42: #{tpu_custom_call.1} parent=11 // pred_check_branch
          %372 = sbr.rel (%p370) target = $region44
        $region43: #{tpu_custom_call.1} parent=11 // pred_region
          _
        $region44: #{tpu_custom_call.1} parent=11 // pred_fallthru
          _
      $region12: #{tpu_custom_call.1} parent=5 // pred_fallthru
        _
      %p373 = scmp.lt.s32.totalorder %s26, 8
      // Predicated region
      $region45: #{tpu_custom_call.1} parent=5 // pred_check
        %p374 = pneg %p373
      $region46: #{tpu_custom_call.1} parent=5 // pred_check_branch
        %376 = sbr.rel (%p374) target = $region48
      $region47: #{tpu_custom_call.1} parent=5 // pred_region
        // Predicated region
        $region49: #{tpu_custom_call.1} parent=47 // pred_check
          %p377 = pneg %p60
        $region50: #{tpu_custom_call.1} parent=47 // pred_check_branch
          %379 = sbr.rel (%p377) target = $region52
        $region51: #{tpu_custom_call.1} parent=47 // pred_region
          %s380 = sand.u32 %s50, 1
          %s381 = scalar_lea.sflag [#allocation4], %s380
          %s382 = sand.u32 %s50, 1
          %s383 = smul.addr %s382, 64
          %s384 = scalar_lea.vmem [#allocation3], %s383
          %s385 = smul.u32 4, %s34
          %387 = vsyncadd %s381, 0
          %s388 = smul.addr %s385, 2
          %s389 = smul.addr %s33, 32
          %s390 = sadd.s32 %s388, %s389
          %s391 = smul.addr %s390, 8
          %s392 = scalar_lea.hbm %s0, %s391
          %s393 = sshll.u32 %s392, 4
          %s394 = int_to_ptr.hbm [resolvable:$true] %s393
          %s395 = sshll.u32 %s384, 4
          %s396 = int_to_ptr.vmem [resolvable:$true] %s395
          %401 = dma.hbm_to_vmem [thread:$0]  %s394, 1024, %s396, %s381, 128, 128, 8
        $region52: #{tpu_custom_call.1} parent=47 // pred_fallthru
          _
        // Predicated region
        $region53: #{tpu_custom_call.1} parent=47 // pred_check
          %p402 = pneg %p96
        $region54: #{tpu_custom_call.1} parent=47 // pred_check_branch
          %404 = sbr.rel (%p402) target = $region56
        $region55: #{tpu_custom_call.1} parent=47 // pred_region
          %s405 = sand.u32 %s26, 1
          %s406 = scalar_lea.sflag [#allocation7], %s405
          %s407 = sand.u32 %s86, 1
          %s408 = smul.addr %s407, 16
          %s409 = scalar_lea.vmem [#allocation6], %s408
          %s410 = smul.u32 %s34, 4
          %s411 = ssub.s32 %s410, 1
          %p412 = scmp.gt.s32.totalorder %s411, 0
          %s413 = scalar_select %p412, %s411, 0
          %415 = vsyncadd %s406, 0
          %s416 = smul.addr %s413, 2
          %s417 = smul.addr %s33, 32
          %s418 = sadd.s32 %s416, %s417
          %s419 = smul.addr %s418, 8
          %s420 = scalar_lea.hbm %s1, %s419
          %s421 = sshll.u32 %s420, 4
          %s422 = int_to_ptr.hbm [resolvable:$true] %s421
          %s423 = sshll.u32 %s409, 4
          %s424 = int_to_ptr.vmem [resolvable:$true] %s423
          %429 = dma.hbm_to_vmem [thread:$0]  %s422, 256, %s424, %s406, 128, 128, 8
        $region56: #{tpu_custom_call.1} parent=47 // pred_fallthru
          _
        // Predicated region
        $region57: #{tpu_custom_call.1} parent=47 // pred_check
          %p430 = pneg %p132
        $region58: #{tpu_custom_call.1} parent=47 // pred_check_branch
          %432 = sbr.rel (%p430) target = $region60
        $region59: #{tpu_custom_call.1} parent=47 // pred_region
          %s433 = sand.u32 %s26, 1
          %s434 = scalar_lea.sflag [#allocation7], %s433
          %s435 = sand.u32 %s122, 1
          %s436 = smul.addr %s435, 16
          %s437 = scalar_lea.vmem [#allocation8], %s436
          %s438 = sadd.s32 %s34, 1
          %s439 = smul.u32 %s438, 4
          %p440 = scmp.lt.s32.totalorder %s439, 15
          %s441 = scalar_select %p440, %s439, 15
          %443 = vsyncadd %s434, 0
          %s444 = smul.addr %s441, 2
          %s445 = smul.addr %s33, 32
          %s446 = sadd.s32 %s444, %s445
          %s447 = smul.addr %s446, 8
          %s448 = scalar_lea.hbm %s2, %s447
          %s449 = sshll.u32 %s448, 4
          %s450 = int_to_ptr.hbm [resolvable:$true] %s449
          %s451 = sshll.u32 %s437, 4
          %s452 = int_to_ptr.vmem [resolvable:$true] %s451
          %457 = dma.hbm_to_vmem [thread:$0]  %s450, 256, %s452, %s434, 128, 128, 8
        $region60: #{tpu_custom_call.1} parent=47 // pred_fallthru
          _
      $region48: #{tpu_custom_call.1} parent=5 // pred_fallthru
        _
      %p458 = scmp.le.s32.totalorder 1, %s26
      %p459 = scmp.lt.s32.totalorder %s26, 9
      %p460 = pnand %p458, %p459
      %p461 = pneg %p460
      // Predicated region
      $region61: #{tpu_custom_call.1} parent=5 // pred_check
        _
      $region62: #{tpu_custom_call.1} parent=5 // pred_check_branch
        %463 = sbr.rel (%p460) target = $region64
      $region63: #{tpu_custom_call.1} parent=5 // pred_region
        %s464 = ssub.s32 %s26, 1
        %s465 = sand.u32 %s53, 1
        %s466 = scalar_lea.sflag [#allocation4], %s465
        %s467 = sand.u32 %s53, 1
        %s468 = smul.addr %s467, 64
        %s469 = scalar_lea.vmem [#allocation3], %s468
        // Predicated region
        $region65: #{tpu_custom_call.1} parent=63 // pred_check
          %p470 = pneg %p66
        $region66: #{tpu_custom_call.1} parent=63 // pred_check_branch
          %472 = sbr.rel (%p470) target = $region68
        $region67: #{tpu_custom_call.1} parent=63 // pred_region
          %474 = dma.done %s466, 1024
        $region68: #{tpu_custom_call.1} parent=63 // pred_fallthru
          _
        %s475 = sand.u32 %s31, 1
        %s476 = scalar_lea.sflag [#allocation7], %s475
        %s477 = sand.u32 %s89, 1
        %s478 = smul.addr %s477, 16
        %s479 = scalar_lea.vmem [#allocation6], %s478
        // Predicated region
        $region69: #{tpu_custom_call.1} parent=63 // pred_check
          %p480 = pneg %p102
        $region70: #{tpu_custom_call.1} parent=63 // pred_check_branch
          %482 = sbr.rel (%p480) target = $region72
        $region71: #{tpu_custom_call.1} parent=63 // pred_region
          %484 = dma.done %s476, 256
        $region72: #{tpu_custom_call.1} parent=63 // pred_fallthru
          _
        %s485 = sand.u32 %s31, 1
        %s486 = scalar_lea.sflag [#allocation7], %s485
        %s487 = sand.u32 %s125, 1
        %s488 = smul.addr %s487, 16
        %s489 = scalar_lea.vmem [#allocation8], %s488
        // Predicated region
        $region73: #{tpu_custom_call.1} parent=63 // pred_check
          %p490 = pneg %p138
        $region74: #{tpu_custom_call.1} parent=63 // pred_check_branch
          %492 = sbr.rel (%p490) target = $region76
        $region75: #{tpu_custom_call.1} parent=63 // pred_region
          %494 = dma.done %s486, 256
        $region76: #{tpu_custom_call.1} parent=63 // pred_fallthru
          _
        %s495 = sand.u32 %s53, 1
        %s496 = scalar_lea.sflag [#allocation4], %s495
        %s497 = sand.u32 %s53, 1
        %s498 = smul.addr %s497, 64
        %s499 = scalar_lea.vmem [#allocation3], %s498
        %p500 = pneg %p66
        %p501 = pneg %p63
        %s502 = sand.u32 %s31, 1
        %s503 = scalar_lea.sflag [#allocation7], %s502
        %s504 = sand.u32 %s89, 1
        %s505 = smul.addr %s504, 16
        %s506 = scalar_lea.vmem [#allocation6], %s505
        %p507 = pneg %p102
        %p508 = pneg %p99
        %s509 = sand.u32 %s31, 1
        %s510 = scalar_lea.sflag [#allocation7], %s509
        %s511 = sand.u32 %s125, 1
        %s512 = smul.addr %s511, 16
        %s513 = scalar_lea.vmem [#allocation8], %s512
        %p514 = pneg %p138
        %p515 = pneg %p135
        %p516 = pneg %p159
        %p517 = pneg %p156
        %p518 = pneg %p180
        %p519 = pneg %p177
        %p520 = pneg %p201
        %p521 = pneg %p198
        %p522 = pneg %p222
        %p523 = pneg %p219
        %p524 = pneg %p243
        %p525 = pneg %p240
        %p526 = pneg %p264
        %p527 = pneg %p261
        %p528 = pneg %p285
        %p529 = pneg %p282
        %p530 = pneg %p306
        %p531 = pneg %p303
        %p532 = pneg %p334
        %p533 = pneg %p331
        %s534 = sand.u32 %s321, 1
        %s535 = scalar_lea.sflag [#allocation5], %s534
        %s536 = sand.u32 %s321, 1
        %s537 = smul.addr %s536, 64
        %s538 = scalar_lea.vmem [#allocation9], %s537
        %s539 = smul.u32 4, %s36
        %s540 = smul.u32 %s36, 4
        %s541 = ssub.s32 %s540, 1
        %p542 = scmp.gt.s32.totalorder %s541, 0
        %s543 = scalar_select %p542, %s541, 0
        %s544 = sadd.s32 %s36, 1
        %s545 = smul.u32 %s544, 4
        %p546 = scmp.lt.s32.totalorder %s545, 15
        %s547 = scalar_select %p546, %s545, 15
        %s548 = smul.u32 4, %s36
        %v549 = vld [vmem:[%s479] sm:$0xff]
        %v550 = vld [vmem:[%s479 + $0x8] sm:$0xff]
        %v551 = vld [vmem:[%s469] sm:$0xff]
        %v552 = vld [vmem:[%s469 + $0x8] sm:$0xff]
        %v553 = vld [vmem:[%s469 + $0x10] sm:$0xff]
        %v554 = vld [vmem:[%s469 + $0x18] sm:$0xff]
        %v555 = vld [vmem:[%s469 + $0x20] sm:$0xff]
        %v556 = vld [vmem:[%s469 + $0x28] sm:$0xff]
        %v557 = vld [vmem:[%s469 + $0x30] sm:$0xff]
        %v558 = vld [vmem:[%s469 + $0x38] sm:$0xff]
        %v559 = vld [vmem:[%s489] sm:$0xff]
        %v560 = vld [vmem:[%s489 + $0x8] sm:$0xff]
        %v561 = vld [vmem:[%s3] sm:$0xff]
        %v562 = vld [vmem:[%s3 + $0x8] sm:$0xff]
        %v563 = vld [vmem:[%s4] sm:$0x1]
        %v565 = vperm.slane %v563, 0
        %vm567 = vcmask 130048
        %v569 = vsel %vm567, %v549, 0
        %v572 = vsel %vm567, %v550, 0
        %v575 = vsel %vm567, %v551, 0
        %v578 = vsel %vm567, %v552, 0
        %v581 = vsel %vm567, %v553, 0
        %v584 = vsel %vm567, %v554, 0
        %v587 = vsel %vm567, %v555, 0
        %v590 = vsel %vm567, %v556, 0
        %v593 = vsel %vm567, %v557, 0
        %v596 = vsel %vm567, %v558, 0
        %v599 = vsel %vm567, %v559, 0
        %v602 = vsel %vm567, %v560, 0
        %604 = vmatpush.msra.mxu0 0.0
        %605 = vmatpush.msra.mxu0 0.0
        %606 = vmatpush.msra.mxu0 0.0
        %607 = vmatpush.msra.mxu0 0.0
        %608 = vmatpush.msra.mxu0 0.0
        %609 = vmatpush.msra.mxu0 0.0
        %610 = vmatpush.msra.mxu0 0.0
        %611 = vmatpush.msra.mxu0 0.0
        %612 = vmatpush.msra.mxu0 0.0
        %613 = vmatpush.msra.mxu0 0.0
        %614 = vmatpush.msra.mxu0 0.0
        %615 = vmatpush.msra.mxu0 0.0
        %616 = vmatpush.msra.mxu0 0.0
        %617 = vmatpush.msra.mxu0 0.0
        %618 = vmatpush.msra.mxu0 %v562
        %619 = vmatpush.msra.mxu0 %v561
        %620 = vmatmul.f32.gmra.mxu0 %v569
        %v621 = vpop.f32.mrf.mxu0
        %v622 = vadd.f32 %v565, %v621
        %623 = vmatmul.f32.gmra.mxu0 %v572
        %v624 = vpop.f32.mrf.mxu0
        %v625 = vadd.f32 %v565, %v624
        %626 = vmatmul.f32.gmra.mxu0 %v575
        %v627 = vpop.f32.mrf.mxu0
        %v628 = vadd.f32 %v565, %v627
        %629 = vmatmul.f32.gmra.mxu0 %v578
        %v630 = vpop.f32.mrf.mxu0
        %v631 = vadd.f32 %v565, %v630
        %632 = vmatmul.f32.gmra.mxu0 %v581
        %v633 = vpop.f32.mrf.mxu0
        %v634 = vadd.f32 %v565, %v633
        %635 = vmatmul.f32.gmra.mxu0 %v584
        %v636 = vpop.f32.mrf.mxu0
        %v637 = vadd.f32 %v565, %v636
        %638 = vmatmul.f32.gmra.mxu0 %v587
        %v639 = vpop.f32.mrf.mxu0
        %v640 = vadd.f32 %v565, %v639
        %641 = vmatmul.f32.gmra.mxu0 %v590
        %v642 = vpop.f32.mrf.mxu0
        %v643 = vadd.f32 %v565, %v642
        %644 = vmatmul.f32.gmra.mxu0 %v593
        %v645 = vpop.f32.mrf.mxu0
        %v646 = vadd.f32 %v565, %v645
        %647 = vmatmul.f32.gmra.mxu0 %v596
        %v648 = vpop.f32.mrf.mxu0
        %v649 = vadd.f32 %v565, %v648
        %650 = vmatmul.f32.gmra.mxu0 %v599
        %v651 = vpop.f32.mrf.mxu0
        %v652 = vadd.f32 %v565, %v651
        %653 = vmatmul.f32.gmra.mxu0 %v602
        %v654 = vpop.f32.mrf.mxu0
        %v655 = vadd.f32 %v565, %v654
        %656 = vdwg.mxu0
        %vm657 = vcmask 261120
        %658 = vst.msk [vmem:[#allocation2] sm:$0xff] %vm657, %v622
        %659 = vst.msk [vmem:[#allocation2 + $0x8] sm:$0xff] %vm657, %v625
        %660 = vst.msk [vmem:[#allocation2 + $0x10] sm:$0xff] %vm657, %v628
        %661 = vst.msk [vmem:[#allocation2 + $0x18] sm:$0xff] %vm657, %v631
        %662 = vst.msk [vmem:[#allocation2 + $0x20] sm:$0xff] %vm657, %v634
        %663 = vst.msk [vmem:[#allocation2 + $0x28] sm:$0xff] %vm657, %v637
        %664 = vst.msk [vmem:[#allocation2 + $0x30] sm:$0xff] %vm657, %v640
        %665 = vst.msk [vmem:[#allocation2 + $0x38] sm:$0xff] %vm657, %v643
        %666 = vst.msk [vmem:[#allocation2 + $0x40] sm:$0xff] %vm657, %v646
        %667 = vst.msk [vmem:[#allocation2 + $0x48] sm:$0xff] %vm657, %v649
        %668 = vst.msk [vmem:[#allocation2 + $0x50] sm:$0xff] %vm657, %v652
        %669 = vst.msk [vmem:[#allocation2 + $0x58] sm:$0xff] %vm657, %v655
        %p670 = scmp.eq.s32.totalorder %s36, 0
        // Predicated region
        $region77: #{tpu_custom_call.1} parent=63 // pred_check
          %p671 = pneg %p670
        $region78: #{tpu_custom_call.1} parent=63 // pred_check_branch
          %673 = sbr.rel (%p671) target = $region80
        $region79: #{tpu_custom_call.1} parent=63 // pred_region
          %674 = vst.msk [vmem:[#allocation2] sm:$0xff] %vm657, 0.0
          %675 = vst.msk [vmem:[#allocation2 + $0x8] sm:$0xff] %vm657, 0.0
        $region80: #{tpu_custom_call.1} parent=63 // pred_fallthru
          _
        %p676 = scmp.eq.s32.totalorder %s36, 3
        // Predicated region
        $region81: #{tpu_custom_call.1} parent=63 // pred_check
          %p677 = pneg %p676
        $region82: #{tpu_custom_call.1} parent=63 // pred_check_branch
          %679 = sbr.rel (%p677) target = $region84
        $region83: #{tpu_custom_call.1} parent=63 // pred_region
          %s680 = scalar_lea.vmem [#allocation2], 80
          %681 = vst.msk [vmem:[%s680] sm:$0xff] %vm657, 0.0
          %682 = vst.msk [vmem:[%s680 + $0x8] sm:$0xff] %vm657, 0.0
        $region84: #{tpu_custom_call.1} parent=63 // pred_fallthru
          _
        %v683 = vld [vmem:[%s5] sm:$0xff]
        %v684 = vld [vmem:[%s5 + $0x8] sm:$0x1]
        %v685 = vld [vmem:[%s6] sm:$0x1]
        %v686 = vld [vmem:[%s7] sm:$0x1]
        %v687 = vld [vmem:[%s8] sm:$0x1]
        %v688 = vld [vmem:[%s9] sm:$0xff]
        %v689 = vld [vmem:[%s9 + $0x8] sm:$0xff]
        %v690 = vld [vmem:[%s9 + $0x10] sm:$0xff]
        %v691 = vld [vmem:[%s9 + $0x18] sm:$0xff]
        %v692 = vld [vmem:[%s10] sm:$0x1]
        %v693 = vlaneseq
        %v694 = vshrl.u32 %v693, 7
        %v695 = vadd.s32 %v694, 8
        %vm696 = vcmp.gt.s32.totalorder %v694, 0
        %vm697 = vcmp.gt.s32.totalorder %v695, 0
        %v698 = vsel %vm696, 1, 0
        %v699 = vsel %vm697, 1, 0
        %v700 = vcvt.s32.f32 %v698
        %v701 = vcvt.s32.f32 %v699
        %vm702 = vcmp.lt.s32.totalorder %v694, 15
        %vm703 = vcmp.lt.s32.totalorder %v695, 15
        %v704 = vsel %vm702, 1, 0
        %v705 = vsel %vm703, 1, 0
        %v706 = vcvt.s32.f32 %v704
        %v707 = vcvt.s32.f32 %v705
        %v708 = vperm.slane %v683, 0
        %v709 = vmul.f32 %v708, %v700
        %v710 = vmul.f32 %v708, %v701
        %v711 = vperm.slane %v683, 3
        %v712 = vmul.f32 %v711, %v700
        %v713 = vmul.f32 %v711, %v701
        %v714 = vperm.slane %v683, 6
        %v715 = vmul.f32 %v714, %v700
        %v716 = vmul.f32 %v714, %v701
        %v717 = vperm.slane %v683, 2
        %v718 = vmul.f32 %v717, %v706
        %v719 = vmul.f32 %v717, %v707
        %v720 = vperm.slane %v683, 5
        %v721 = vmul.f32 %v720, %v706
        %v722 = vmul.f32 %v720, %v707
        %v723 = vperm.slane %v684, 0
        %v724 = vmul.f32 %v723, %v706
        %v725 = vmul.f32 %v723, %v707
        %v726 = vld [vmem:[#allocation2] sm:$0xff]
        %v727 = vld [vmem:[#allocation2 + $0x8] sm:$0xff]
        %v728 = vld [vmem:[#allocation2 + $0x10] sm:$0xff]
        %v729 = vld [vmem:[#allocation2 + $0x18] sm:$0xff]
        %v730 = vld [vmem:[#allocation2 + $0x20] sm:$0xff]
        %v731 = vld [vmem:[#allocation2 + $0x28] sm:$0xff]
        %v732 = vld [vmem:[#allocation2 + $0x30] sm:$0xff]
        %v733 = vld [vmem:[#allocation2 + $0x38] sm:$0xff]
        %v734 = vld [vmem:[#allocation2 + $0x40] sm:$0xff]
        %v735 = vld [vmem:[#allocation2 + $0x48] sm:$0xff]
        %v736 = vld [vmem:[#allocation2 + $0x50] sm:$0xff]
        %v737 = vld [vmem:[#allocation2 + $0x58] sm:$0xff]
        %v738 = vperm.slane %v683, 4
        %v739 = vmul.f32 %v728, %v738
        %v740 = vmul.f32 %v729, %v738
        %v741 = vmul.f32 %v730, %v738
        %v742 = vmul.f32 %v731, %v738
        %v743 = vmul.f32 %v732, %v738
        %v744 = vmul.f32 %v733, %v738
        %v745 = vmul.f32 %v734, %v738
        %v746 = vmul.f32 %v735, %v738
        %v748 = vperm.slane %v685, 0
        %v750 = vadd.f32 %v739, %v748
        %v751 = vadd.f32 %v740, %v748
        %v752 = vadd.f32 %v741, %v748
        %v753 = vadd.f32 %v742, %v748
        %v754 = vadd.f32 %v743, %v748
        %v755 = vadd.f32 %v744, %v748
        %v756 = vadd.f32 %v745, %v748
        %v757 = vadd.f32 %v746, %v748
        %v758 = vperm.slane %v683, 1
        %v759 = vmul.f32 %v726, %v758
        %v760 = vmul.f32 %v727, %v758
        %v761 = vmul.f32 %v728, %v758
        %v762 = vmul.f32 %v729, %v758
        %v763 = vmul.f32 %v730, %v758
        %v764 = vmul.f32 %v731, %v758
        %v765 = vmul.f32 %v732, %v758
        %v766 = vmul.f32 %v733, %v758
        %v767 = vadd.f32 %v750, %v759
        %v768 = vadd.f32 %v751, %v760
        %v769 = vadd.f32 %v752, %v761
        %v770 = vadd.f32 %v753, %v762
        %v771 = vadd.f32 %v754, %v763
        %v772 = vadd.f32 %v755, %v764
        %v773 = vadd.f32 %v756, %v765
        %v774 = vadd.f32 %v757, %v766
        %v775 = vrot.slane %v726, 1
        %v776 = vrot.slane %v728, 1
        %v777 = vrot.slane %v730, 1
        %v778 = vrot.slane %v732, 1
        %v779 = vrot.slane %v727, 1
        %v780 = vrot.slane %v729, 1
        %v781 = vrot.slane %v731, 1
        %v782 = vrot.slane %v733, 1
        %vm783 = vcmp.lt.s32.totalorder %v694, 7
        %v784 = vsel %vm783, %v775, %v779
        %v785 = vsel %vm783, %v776, %v780
        %v786 = vsel %vm783, %v777, %v781
        %v787 = vsel %vm783, %v778, %v782
        %v788 = vsel %vm783, %v779, %v775
        %v789 = vsel %vm783, %v780, %v776
        %v790 = vsel %vm783, %v781, %v777
        %v791 = vsel %vm783, %v782, %v778
        %v792 = vmul.f32 %v784, %v718
        %v793 = vmul.f32 %v788, %v719
        %v794 = vmul.f32 %v785, %v718
        %v795 = vmul.f32 %v789, %v719
        %v796 = vmul.f32 %v786, %v718
        %v797 = vmul.f32 %v790, %v719
        %v798 = vmul.f32 %v787, %v718
        %v799 = vmul.f32 %v791, %v719
        %v800 = vadd.f32 %v767, %v792
        %v801 = vadd.f32 %v768, %v793
        %v802 = vadd.f32 %v769, %v794
        %v803 = vadd.f32 %v770, %v795
        %v804 = vadd.f32 %v771, %v796
        %v805 = vadd.f32 %v772, %v797
        %v806 = vadd.f32 %v773, %v798
        %v807 = vadd.f32 %v774, %v799
        %v808 = vrot.slane %v726, 7
        %v809 = vrot.slane %v728, 7
        %v810 = vrot.slane %v730, 7
        %v811 = vrot.slane %v732, 7
        %v812 = vrot.slane %v727, 7
        %v813 = vrot.slane %v729, 7
        %v814 = vrot.slane %v731, 7
        %v815 = vrot.slane %v733, 7
        %vm816 = vcmp.lt.s32.totalorder %v694, 1
        %v817 = vsel %vm816, %v808, %v812
        %v818 = vsel %vm816, %v809, %v813
        %v819 = vsel %vm816, %v810, %v814
        %v820 = vsel %vm816, %v811, %v815
        %v821 = vsel %vm816, %v812, %v808
        %v822 = vsel %vm816, %v813, %v809
        %v823 = vsel %vm816, %v814, %v810
        %v824 = vsel %vm816, %v815, %v811
        %v825 = vmul.f32 %v821, %v709
        %v826 = vmul.f32 %v817, %v710
        %v827 = vmul.f32 %v822, %v709
        %v828 = vmul.f32 %v818, %v710
        %v829 = vmul.f32 %v823, %v709
        %v830 = vmul.f32 %v819, %v710
        %v831 = vmul.f32 %v824, %v709
        %v832 = vmul.f32 %v820, %v710
        %v833 = vadd.f32 %v800, %v825
        %v834 = vadd.f32 %v801, %v826
        %v835 = vadd.f32 %v802, %v827
        %v836 = vadd.f32 %v803, %v828
        %v837 = vadd.f32 %v804, %v829
        %v838 = vadd.f32 %v805, %v830
        %v839 = vadd.f32 %v806, %v831
        %v840 = vadd.f32 %v807, %v832
        %v841 = vrot.slane %v734, 1
        %v842 = vrot.slane %v735, 1
        %v843 = vsel %vm783, %v841, %v842
        %v844 = vsel %vm783, %v842, %v841
        %v845 = vmul.f32 %v785, %v721
        %v846 = vmul.f32 %v789, %v722
        %v847 = vmul.f32 %v786, %v721
        %v848 = vmul.f32 %v790, %v722
        %v849 = vmul.f32 %v787, %v721
        %v850 = vmul.f32 %v791, %v722
        %v851 = vmul.f32 %v843, %v721
        %v852 = vmul.f32 %v844, %v722
        %v853 = vadd.f32 %v833, %v845
        %v854 = vadd.f32 %v834, %v846
        %v855 = vadd.f32 %v835, %v847
        %v856 = vadd.f32 %v836, %v848
        %v857 = vadd.f32 %v837, %v849
        %v858 = vadd.f32 %v838, %v850
        %v859 = vadd.f32 %v839, %v851
        %v860 = vadd.f32 %v840, %v852
        %v861 = vrot.slane %v734, 7
        %v862 = vrot.slane %v735, 7
        %v863 = vsel %vm816, %v861, %v862
        %v864 = vsel %vm816, %v862, %v861
        %v865 = vmul.f32 %v822, %v712
        %v866 = vmul.f32 %v818, %v713
        %v867 = vmul.f32 %v823, %v712
        %v868 = vmul.f32 %v819, %v713
        %v869 = vmul.f32 %v824, %v712
        %v870 = vmul.f32 %v820, %v713
        %v871 = vmul.f32 %v864, %v712
        %v872 = vmul.f32 %v863, %v713
        %v873 = vadd.f32 %v853, %v865
        %v874 = vadd.f32 %v854, %v866
        %v875 = vadd.f32 %v855, %v867
        %v876 = vadd.f32 %v856, %v868
        %v877 = vadd.f32 %v857, %v869
        %v878 = vadd.f32 %v858, %v870
        %v879 = vadd.f32 %v859, %v871
        %v880 = vadd.f32 %v860, %v872
        %v881 = vperm.slane %v683, 7
        %v882 = vmul.f32 %v730, %v881
        %v883 = vmul.f32 %v731, %v881
        %v884 = vmul.f32 %v732, %v881
        %v885 = vmul.f32 %v733, %v881
        %v886 = vmul.f32 %v734, %v881
        %v887 = vmul.f32 %v735, %v881
        %v888 = vmul.f32 %v736, %v881
        %v889 = vmul.f32 %v737, %v881
        %v890 = vadd.f32 %v873, %v882
        %v891 = vadd.f32 %v874, %v883
        %v892 = vadd.f32 %v875, %v884
        %v893 = vadd.f32 %v876, %v885
        %v894 = vadd.f32 %v877, %v886
        %v895 = vadd.f32 %v878, %v887
        %v896 = vadd.f32 %v879, %v888
        %v897 = vadd.f32 %v880, %v889
        %v898 = vrot.slane %v736, 1
        %v899 = vrot.slane %v737, 1
        %v900 = vsel %vm783, %v898, %v899
        %v901 = vsel %vm783, %v899, %v898
        %v902 = vmul.f32 %v786, %v724
        %v903 = vmul.f32 %v790, %v725
        %v904 = vmul.f32 %v787, %v724
        %v905 = vmul.f32 %v791, %v725
        %v906 = vmul.f32 %v843, %v724
        %v907 = vmul.f32 %v844, %v725
        %v908 = vmul.f32 %v900, %v724
        %v909 = vmul.f32 %v901, %v725
        %v910 = vadd.f32 %v890, %v902
        %v911 = vadd.f32 %v891, %v903
        %v912 = vadd.f32 %v892, %v904
        %v913 = vadd.f32 %v893, %v905
        %v914 = vadd.f32 %v894, %v906
        %v915 = vadd.f32 %v895, %v907
        %v916 = vadd.f32 %v896, %v908
        %v917 = vadd.f32 %v897, %v909
        %v918 = vrot.slane %v736, 7
        %v919 = vrot.slane %v737, 7
        %v920 = vsel %vm816, %v918, %v919
        %v921 = vsel %vm816, %v919, %v918
        %v922 = vmul.f32 %v823, %v715
        %v923 = vmul.f32 %v819, %v716
        %v924 = vmul.f32 %v824, %v715
        %v925 = vmul.f32 %v820, %v716
        %v926 = vmul.f32 %v864, %v715
        %v927 = vmul.f32 %v863, %v716
        %v928 = vmul.f32 %v921, %v715
        %v929 = vmul.f32 %v920, %v716
        %v930 = vadd.f32 %v910, %v922
        %v931 = vadd.f32 %v911, %v923
        %v932 = vadd.f32 %v912, %v924
        %v933 = vadd.f32 %v913, %v925
        %v934 = vadd.f32 %v914, %v926
        %v935 = vadd.f32 %v915, %v927
        %v936 = vadd.f32 %v916, %v928
        %v937 = vadd.f32 %v917, %v929
        %v938 = vadd.f32 %v930, %v728
        %v939 = vadd.f32 %v931, %v729
        %v940 = vadd.f32 %v932, %v730
        %v941 = vadd.f32 %v933, %v731
        %v942 = vadd.f32 %v934, %v732
        %v943 = vadd.f32 %v935, %v733
        %v944 = vadd.f32 %v936, %v734
        %v945 = vadd.f32 %v937, %v735
        %v946 = vsel %vm657, %v938, 0.0
        %947 = vadd.xlane.f32.xlu0 %v946
        %v948 = vpop.xlane.xlu0 %947
        %v949 = vsel %vm657, %v939, 0.0
        %950 = vadd.xlane.f32.xlu0 %v949
        %v951 = vpop.xlane.xlu0 %950
        %v952 = vsel %vm657, %v940, 0.0
        %953 = vadd.xlane.f32.xlu0 %v952
        %v954 = vpop.xlane.xlu0 %953
        %v955 = vsel %vm657, %v941, 0.0
        %956 = vadd.xlane.f32.xlu0 %v955
        %v957 = vpop.xlane.xlu0 %956
        %v958 = vsel %vm657, %v942, 0.0
        %959 = vadd.xlane.f32.xlu0 %v958
        %v960 = vpop.xlane.xlu0 %959
        %v961 = vsel %vm657, %v943, 0.0
        %962 = vadd.xlane.f32.xlu0 %v961
        %v963 = vpop.xlane.xlu0 %962
        %v964 = vsel %vm657, %v944, 0.0
        %965 = vadd.xlane.f32.xlu0 %v964
        %v966 = vpop.xlane.xlu0 %965
        %v967 = vsel %vm657, %v945, 0.0
        %968 = vadd.xlane.f32.xlu0 %v967
        %v969 = vpop.xlane.xlu0 %968
        %v970 = vrcp.pop 32.0
        %v971 = vmul.f32 32.0, %v970
        %v972 = vsub.f32 1.0, %v971
        %v973 = vmul.f32 %v970, %v972
        %v974 = vadd.f32 %v970, %v973
        %vm975 = vweird.f32 %v970
        %v976 = vsel %vm975, %v970, %v974
        %v977 = vmul.f32 %v948, %v976
        %v978 = vmul.f32 %v951, %v976
        %v979 = vmul.f32 %v954, %v976
        %v980 = vmul.f32 %v957, %v976
        %v981 = vmul.f32 %v960, %v976
        %v982 = vmul.f32 %v963, %v976
        %v983 = vmul.f32 %v966, %v976
        %v984 = vmul.f32 %v969, %v976
        %v985 = vsub.f32 %v938, %v977
        %v986 = vsub.f32 %v939, %v978
        %v987 = vsub.f32 %v940, %v979
        %v988 = vsub.f32 %v941, %v980
        %v989 = vsub.f32 %v942, %v981
        %v990 = vsub.f32 %v943, %v982
        %v991 = vsub.f32 %v944, %v983
        %v992 = vsub.f32 %v945, %v984
        %v993 = vmul.f32 %v985, %v985
        %v994 = vmul.f32 %v986, %v986
        %v995 = vmul.f32 %v987, %v987
        %v996 = vmul.f32 %v988, %v988
        %v997 = vmul.f32 %v989, %v989
        %v998 = vmul.f32 %v990, %v990
        %v999 = vmul.f32 %v991, %v991
        %v1000 = vmul.f32 %v992, %v992
        %v1001 = vsel %vm657, %v993, 0.0
        %1002 = vadd.xlane.f32.xlu0 %v1001
        %v1003 = vpop.xlane.xlu0 %1002
        %v1004 = vsel %vm657, %v994, 0.0
        %1005 = vadd.xlane.f32.xlu0 %v1004
        %v1006 = vpop.xlane.xlu0 %1005
        %v1007 = vsel %vm657, %v995, 0.0
        %1008 = vadd.xlane.f32.xlu0 %v1007
        %v1009 = vpop.xlane.xlu0 %1008
        %v1010 = vsel %vm657, %v996, 0.0
        %1011 = vadd.xlane.f32.xlu0 %v1010
        %v1012 = vpop.xlane.xlu0 %1011
        %v1013 = vsel %vm657, %v997, 0.0
        %1014 = vadd.xlane.f32.xlu0 %v1013
        %v1015 = vpop.xlane.xlu0 %1014
        %v1016 = vsel %vm657, %v998, 0.0
        %1017 = vadd.xlane.f32.xlu0 %v1016
        %v1018 = vpop.xlane.xlu0 %1017
        %v1019 = vsel %vm657, %v999, 0.0
        %1020 = vadd.xlane.f32.xlu0 %v1019
        %v1021 = vpop.xlane.xlu0 %1020
        %v1022 = vsel %vm657, %v1000, 0.0
        %1023 = vadd.xlane.f32.xlu0 %v1022
        %v1024 = vpop.xlane.xlu0 %1023
        %v1025 = vmul.f32 %v1003, %v976
        %v1026 = vmul.f32 %v1006, %v976
        %v1027 = vmul.f32 %v1009, %v976
        %v1028 = vmul.f32 %v1012, %v976
        %v1029 = vmul.f32 %v1015, %v976
        %v1030 = vmul.f32 %v1018, %v976
        %v1031 = vmul.f32 %v1021, %v976
        %v1032 = vmul.f32 %v1024, %v976
        %v1033 = vadd.f32 %v1025, 1e-05
        %v1034 = vadd.f32 %v1026, 1e-05
        %v1035 = vadd.f32 %v1027, 1e-05
        %v1036 = vadd.f32 %v1028, 1e-05
        %v1037 = vadd.f32 %v1029, 1e-05
        %v1038 = vadd.f32 %v1030, 1e-05
        %v1039 = vadd.f32 %v1031, 1e-05
        %v1040 = vadd.f32 %v1032, 1e-05
        %v1041 = vrsqrt.pop %v1033
        %v1042 = vmul.f32 %v1041, %v1033
        %v1043 = vmul.f32 %v1042, %v1041
        %v1044 = vmul.f32 0.5, %v1043
        %v1045 = vsub.f32 1.5, %v1044
        %v1046 = vmul.f32 %v1041, %v1045
        %vm1047 = vweird.f32 %v1033
        %vm1048 = vweird.f32 %v1041
        %vm1049 = vmor %vm1047, %vm1048
        %v1050 = vsel %vm1049, %v1041, %v1046
        %v1051 = vrsqrt.pop %v1034
        %v1052 = vmul.f32 %v1051, %v1034
        %v1053 = vmul.f32 %v1052, %v1051
        %v1054 = vmul.f32 0.5, %v1053
        %v1055 = vsub.f32 1.5, %v1054
        %v1056 = vmul.f32 %v1051, %v1055
        %vm1057 = vweird.f32 %v1034
        %vm1058 = vweird.f32 %v1051
        %vm1059 = vmor %vm1057, %vm1058
        %v1060 = vsel %vm1059, %v1051, %v1056
        %v1061 = vrsqrt.pop %v1035
        %v1062 = vmul.f32 %v1061, %v1035
        %v1063 = vmul.f32 %v1062, %v1061
        %v1064 = vmul.f32 0.5, %v1063
        %v1065 = vsub.f32 1.5, %v1064
        %v1066 = vmul.f32 %v1061, %v1065
        %vm1067 = vweird.f32 %v1035
        %vm1068 = vweird.f32 %v1061
        %vm1069 = vmor %vm1067, %vm1068
        %v1070 = vsel %vm1069, %v1061, %v1066
        %v1071 = vrsqrt.pop %v1036
        %v1072 = vmul.f32 %v1071, %v1036
        %v1073 = vmul.f32 %v1072, %v1071
        %v1074 = vmul.f32 0.5, %v1073
        %v1075 = vsub.f32 1.5, %v1074
        %v1076 = vmul.f32 %v1071, %v1075
        %vm1077 = vweird.f32 %v1036
        %vm1078 = vweird.f32 %v1071
        %vm1079 = vmor %vm1077, %vm1078
        %v1080 = vsel %vm1079, %v1071, %v1076
        %v1081 = vrsqrt.pop %v1037
        %v1082 = vmul.f32 %v1081, %v1037
        %v1083 = vmul.f32 %v1082, %v1081
        %v1084 = vmul.f32 0.5, %v1083
        %v1085 = vsub.f32 1.5, %v1084
        %v1086 = vmul.f32 %v1081, %v1085
        %vm1087 = vweird.f32 %v1037
        %vm1088 = vweird.f32 %v1081
        %vm1089 = vmor %vm1087, %vm1088
        %v1090 = vsel %vm1089, %v1081, %v1086
        %v1091 = vrsqrt.pop %v1038
        %v1092 = vmul.f32 %v1091, %v1038
        %v1093 = vmul.f32 %v1092, %v1091
        %v1094 = vmul.f32 0.5, %v1093
        %v1095 = vsub.f32 1.5, %v1094
        %v1096 = vmul.f32 %v1091, %v1095
        %vm1097 = vweird.f32 %v1038
        %vm1098 = vweird.f32 %v1091
        %vm1099 = vmor %vm1097, %vm1098
        %v1100 = vsel %vm1099, %v1091, %v1096
        %v1101 = vrsqrt.pop %v1039
        %v1102 = vmul.f32 %v1101, %v1039
        %v1103 = vmul.f32 %v1102, %v1101
        %v1104 = vmul.f32 0.5, %v1103
        %v1105 = vsub.f32 1.5, %v1104
        %v1106 = vmul.f32 %v1101, %v1105
        %vm1107 = vweird.f32 %v1039
        %vm1108 = vweird.f32 %v1101
        %vm1109 = vmor %vm1107, %vm1108
        %v1110 = vsel %vm1109, %v1101, %v1106
        %v1111 = vrsqrt.pop %v1040
        %v1112 = vmul.f32 %v1111, %v1040
        %v1113 = vmul.f32 %v1112, %v1111
        %v1114 = vmul.f32 0.5, %v1113
        %v1115 = vsub.f32 1.5, %v1114
        %v1116 = vmul.f32 %v1111, %v1115
        %vm1117 = vweird.f32 %v1040
        %vm1118 = vweird.f32 %v1111
        %vm1119 = vmor %vm1117, %vm1118
        %v1120 = vsel %vm1119, %v1111, %v1116
        %v1121 = vmul.f32 %v985, %v1050
        %v1122 = vmul.f32 %v986, %v1060
        %v1123 = vmul.f32 %v987, %v1070
        %v1124 = vmul.f32 %v988, %v1080
        %v1125 = vmul.f32 %v989, %v1090
        %v1126 = vmul.f32 %v990, %v1100
        %v1127 = vmul.f32 %v991, %v1110
        %v1128 = vmul.f32 %v992, %v1120
        %v1130 = vperm.slane %v686, 0
        %v1132 = vmul.f32 %v1121, %v1130
        %v1133 = vmul.f32 %v1122, %v1130
        %v1134 = vmul.f32 %v1123, %v1130
        %v1135 = vmul.f32 %v1124, %v1130
        %v1136 = vmul.f32 %v1125, %v1130
        %v1137 = vmul.f32 %v1126, %v1130
        %v1138 = vmul.f32 %v1127, %v1130
        %v1139 = vmul.f32 %v1128, %v1130
        %v1141 = vperm.slane %v687, 0
        %v1143 = vadd.f32 %v1132, %v1141
        %v1144 = vadd.f32 %v1133, %v1141
        %v1145 = vadd.f32 %v1134, %v1141
        %v1146 = vadd.f32 %v1135, %v1141
        %v1147 = vadd.f32 %v1136, %v1141
        %v1148 = vadd.f32 %v1137, %v1141
        %v1149 = vadd.f32 %v1138, %v1141
        %v1150 = vadd.f32 %v1139, %v1141
        %v1151 = vmul.f32 %v1143, 0.5
        %v1152 = vmul.f32 %v1144, 0.5
        %v1153 = vmul.f32 %v1145, 0.5
        %v1154 = vmul.f32 %v1146, 0.5
        %v1155 = vmul.f32 %v1147, 0.5
        %v1156 = vmul.f32 %v1148, 0.5
        %v1157 = vmul.f32 %v1149, 0.5
        %v1158 = vmul.f32 %v1150, 0.5
        %v1159 = vmul.f32 %v1143, 0.70710677
        %v1160 = vmul.f32 %v1144, 0.70710677
        %v1161 = vmul.f32 %v1145, 0.70710677
        %v1162 = vmul.f32 %v1146, 0.70710677
        %v1163 = vmul.f32 %v1147, 0.70710677
        %v1164 = vmul.f32 %v1148, 0.70710677
        %v1165 = vmul.f32 %v1149, 0.70710677
        %v1166 = vmul.f32 %v1150, 0.70710677
        %vm1167 = vcmp.ge.f32.partialorder %v1159, 0.0
        %vm1168 = vcmp.ge.f32.partialorder %v1160, 0.0
        %vm1169 = vcmp.ge.f32.partialorder %v1161, 0.0
        %vm1170 = vcmp.ge.f32.partialorder %v1162, 0.0
        %vm1171 = vcmp.ge.f32.partialorder %v1163, 0.0
        %vm1172 = vcmp.ge.f32.partialorder %v1164, 0.0
        %vm1173 = vcmp.ge.f32.partialorder %v1165, 0.0
        %vm1174 = vcmp.ge.f32.partialorder %v1166, 0.0
        %v1175 = vsel %vm1167, 1.0, -1.0
        %v1176 = vsel %vm1168, 1.0, -1.0
        %v1177 = vsel %vm1169, 1.0, -1.0
        %v1178 = vsel %vm1170, 1.0, -1.0
        %v1179 = vsel %vm1171, 1.0, -1.0
        %v1180 = vsel %vm1172, 1.0, -1.0
        %v1181 = vsel %vm1173, 1.0, -1.0
        %v1182 = vsel %vm1174, 1.0, -1.0
        %v1183 = vand.u32 2147483647, %v1159
        %v1184 = vand.u32 2147483647, %v1160
        %v1185 = vand.u32 2147483647, %v1161
        %v1186 = vand.u32 2147483647, %v1162
        %v1187 = vand.u32 2147483647, %v1163
        %v1188 = vand.u32 2147483647, %v1164
        %v1189 = vand.u32 2147483647, %v1165
        %v1190 = vand.u32 2147483647, %v1166
        %v1191 = vmul.f32 %v1183, 0.3275911
        %v1192 = vmul.f32 %v1184, 0.3275911
        %v1193 = vmul.f32 %v1185, 0.3275911
        %v1194 = vmul.f32 %v1186, 0.3275911
        %v1195 = vmul.f32 %v1187, 0.3275911
        %v1196 = vmul.f32 %v1188, 0.3275911
        %v1197 = vmul.f32 %v1189, 0.3275911
        %v1198 = vmul.f32 %v1190, 0.3275911
        %v1199 = vadd.f32 %v1191, 1.0
        %v1200 = vadd.f32 %v1192, 1.0
        %v1201 = vadd.f32 %v1193, 1.0
        %v1202 = vadd.f32 %v1194, 1.0
        %v1203 = vadd.f32 %v1195, 1.0
        %v1204 = vadd.f32 %v1196, 1.0
        %v1205 = vadd.f32 %v1197, 1.0
        %v1206 = vadd.f32 %v1198, 1.0
        %v1207 = vrcp.pop %v1199
        %v1208 = vrcp.pop %v1200
        %v1209 = vrcp.pop %v1201
        %v1210 = vrcp.pop %v1202
        %v1211 = vrcp.pop %v1203
        %v1212 = vrcp.pop %v1204
        %v1213 = vrcp.pop %v1205
        %v1214 = vrcp.pop %v1206
        %v1215 = vmul.f32 %v1199, %v1207
        %v1216 = vmul.f32 %v1200, %v1208
        %v1217 = vmul.f32 %v1201, %v1209
        %v1218 = vmul.f32 %v1202, %v1210
        %v1219 = vmul.f32 %v1203, %v1211
        %v1220 = vmul.f32 %v1204, %v1212
        %v1221 = vmul.f32 %v1205, %v1213
        %v1222 = vmul.f32 %v1206, %v1214
        %v1223 = vsub.f32 2.0, %v1215
        %v1224 = vsub.f32 2.0, %v1216
        %v1225 = vsub.f32 2.0, %v1217
        %v1226 = vsub.f32 2.0, %v1218
        %v1227 = vsub.f32 2.0, %v1219
        %v1228 = vsub.f32 2.0, %v1220
        %v1229 = vsub.f32 2.0, %v1221
        %v1230 = vsub.f32 2.0, %v1222
        %v1231 = vmul.f32 %v1207, %v1223
        %v1232 = vmul.f32 %v1208, %v1224
        %v1233 = vmul.f32 %v1209, %v1225
        %v1234 = vmul.f32 %v1210, %v1226
        %v1235 = vmul.f32 %v1211, %v1227
        %v1236 = vmul.f32 %v1212, %v1228
        %v1237 = vmul.f32 %v1213, %v1229
        %v1238 = vmul.f32 %v1214, %v1230
        %v1239 = vmul.f32 %v1231, 1.0614054
        %v1240 = vmul.f32 %v1232, 1.0614054
        %v1241 = vmul.f32 %v1233, 1.0614054
        %v1242 = vmul.f32 %v1234, 1.0614054
        %v1243 = vmul.f32 %v1235, 1.0614054
        %v1244 = vmul.f32 %v1236, 1.0614054
        %v1245 = vmul.f32 %v1237, 1.0614054
        %v1246 = vmul.f32 %v1238, 1.0614054
        %v1247 = vadd.f32 %v1239, -1.4531521
        %v1248 = vadd.f32 %v1240, -1.4531521
        %v1249 = vadd.f32 %v1241, -1.4531521
        %v1250 = vadd.f32 %v1242, -1.4531521
        %v1251 = vadd.f32 %v1243, -1.4531521
        %v1252 = vadd.f32 %v1244, -1.4531521
        %v1253 = vadd.f32 %v1245, -1.4531521
        %v1254 = vadd.f32 %v1246, -1.4531521
        %v1255 = vmul.f32 %v1247, %v1231
        %v1256 = vmul.f32 %v1248, %v1232
        %v1257 = vmul.f32 %v1249, %v1233
        %v1258 = vmul.f32 %v1250, %v1234
        %v1259 = vmul.f32 %v1251, %v1235
        %v1260 = vmul.f32 %v1252, %v1236
        %v1261 = vmul.f32 %v1253, %v1237
        %v1262 = vmul.f32 %v1254, %v1238
        %v1263 = vadd.f32 %v1255, 1.4214138
        %v1264 = vadd.f32 %v1256, 1.4214138
        %v1265 = vadd.f32 %v1257, 1.4214138
        %v1266 = vadd.f32 %v1258, 1.4214138
        %v1267 = vadd.f32 %v1259, 1.4214138
        %v1268 = vadd.f32 %v1260, 1.4214138
        %v1269 = vadd.f32 %v1261, 1.4214138
        %v1270 = vadd.f32 %v1262, 1.4214138
        %v1271 = vmul.f32 %v1263, %v1231
        %v1272 = vmul.f32 %v1264, %v1232
        %v1273 = vmul.f32 %v1265, %v1233
        %v1274 = vmul.f32 %v1266, %v1234
        %v1275 = vmul.f32 %v1267, %v1235
        %v1276 = vmul.f32 %v1268, %v1236
        %v1277 = vmul.f32 %v1269, %v1237
        %v1278 = vmul.f32 %v1270, %v1238
        %v1279 = vadd.f32 %v1271, -0.28449672
        %v1280 = vadd.f32 %v1272, -0.28449672
        %v1281 = vadd.f32 %v1273, -0.28449672
        %v1282 = vadd.f32 %v1274, -0.28449672
        %v1283 = vadd.f32 %v1275, -0.28449672
        %v1284 = vadd.f32 %v1276, -0.28449672
        %v1285 = vadd.f32 %v1277, -0.28449672
        %v1286 = vadd.f32 %v1278, -0.28449672
        %v1287 = vmul.f32 %v1279, %v1231
        %v1288 = vmul.f32 %v1280, %v1232
        %v1289 = vmul.f32 %v1281, %v1233
        %v1290 = vmul.f32 %v1282, %v1234
        %v1291 = vmul.f32 %v1283, %v1235
        %v1292 = vmul.f32 %v1284, %v1236
        %v1293 = vmul.f32 %v1285, %v1237
        %v1294 = vmul.f32 %v1286, %v1238
        %v1295 = vadd.f32 %v1287, 0.2548296
        %v1296 = vadd.f32 %v1288, 0.2548296
        %v1297 = vadd.f32 %v1289, 0.2548296
        %v1298 = vadd.f32 %v1290, 0.2548296
        %v1299 = vadd.f32 %v1291, 0.2548296
        %v1300 = vadd.f32 %v1292, 0.2548296
        %v1301 = vadd.f32 %v1293, 0.2548296
        %v1302 = vadd.f32 %v1294, 0.2548296
        %v1303 = vmul.f32 %v1295, %v1231
        %v1304 = vmul.f32 %v1296, %v1232
        %v1305 = vmul.f32 %v1297, %v1233
        %v1306 = vmul.f32 %v1298, %v1234
        %v1307 = vmul.f32 %v1299, %v1235
        %v1308 = vmul.f32 %v1300, %v1236
        %v1309 = vmul.f32 %v1301, %v1237
        %v1310 = vmul.f32 %v1302, %v1238
        %v1311 = vsub.f32 0.0, %v1183
        %v1312 = vsub.f32 0.0, %v1184
        %v1313 = vsub.f32 0.0, %v1185
        %v1314 = vsub.f32 0.0, %v1186
        %v1315 = vsub.f32 0.0, %v1187
        %v1316 = vsub.f32 0.0, %v1188
        %v1317 = vsub.f32 0.0, %v1189
        %v1318 = vsub.f32 0.0, %v1190
        %v1319 = vmul.f32 %v1311, %v1183
        %v1320 = vmul.f32 %v1312, %v1184
        %v1321 = vmul.f32 %v1313, %v1185
        %v1322 = vmul.f32 %v1314, %v1186
        %v1323 = vmul.f32 %v1315, %v1187
        %v1324 = vmul.f32 %v1316, %v1188
        %v1325 = vmul.f32 %v1317, %v1189
        %v1326 = vmul.f32 %v1318, %v1190
        %v1327 = vmul.f32 %v1319, 1.442695
        %v1328 = vpow.pop %v1327
        %v1329 = vmul.f32 %v1320, 1.442695
        %v1330 = vpow.pop %v1329
        %v1331 = vmul.f32 %v1321, 1.442695
        %v1332 = vpow.pop %v1331
        %v1333 = vmul.f32 %v1322, 1.442695
        %v1334 = vpow.pop %v1333
        %v1335 = vmul.f32 %v1323, 1.442695
        %v1336 = vpow.pop %v1335
        %v1337 = vmul.f32 %v1324, 1.442695
        %v1338 = vpow.pop %v1337
        %v1339 = vmul.f32 %v1325, 1.442695
        %v1340 = vpow.pop %v1339
        %v1341 = vmul.f32 %v1326, 1.442695
        %v1342 = vpow.pop %v1341
        %v1343 = vmul.f32 %v1303, %v1328
        %v1344 = vmul.f32 %v1304, %v1330
        %v1345 = vmul.f32 %v1305, %v1332
        %v1346 = vmul.f32 %v1306, %v1334
        %v1347 = vmul.f32 %v1307, %v1336
        %v1348 = vmul.f32 %v1308, %v1338
        %v1349 = vmul.f32 %v1309, %v1340
        %v1350 = vmul.f32 %v1310, %v1342
        %v1351 = vsub.f32 1.0, %v1343
        %v1352 = vsub.f32 1.0, %v1344
        %v1353 = vsub.f32 1.0, %v1345
        %v1354 = vsub.f32 1.0, %v1346
        %v1355 = vsub.f32 1.0, %v1347
        %v1356 = vsub.f32 1.0, %v1348
        %v1357 = vsub.f32 1.0, %v1349
        %v1358 = vsub.f32 1.0, %v1350
        %v1359 = vmul.f32 %v1175, %v1351
        %v1360 = vmul.f32 %v1176, %v1352
        %v1361 = vmul.f32 %v1177, %v1353
        %v1362 = vmul.f32 %v1178, %v1354
        %v1363 = vmul.f32 %v1179, %v1355
        %v1364 = vmul.f32 %v1180, %v1356
        %v1365 = vmul.f32 %v1181, %v1357
        %v1366 = vmul.f32 %v1182, %v1358
        %v1367 = vadd.f32 %v1359, 1.0
        %v1368 = vadd.f32 %v1360, 1.0
        %v1369 = vadd.f32 %v1361, 1.0
        %v1370 = vadd.f32 %v1362, 1.0
        %v1371 = vadd.f32 %v1363, 1.0
        %v1372 = vadd.f32 %v1364, 1.0
        %v1373 = vadd.f32 %v1365, 1.0
        %v1374 = vadd.f32 %v1366, 1.0
        %v1375 = vmul.f32 %v1151, %v1367
        %v1376 = vmul.f32 %v1152, %v1368
        %v1377 = vmul.f32 %v1153, %v1369
        %v1378 = vmul.f32 %v1154, %v1370
        %v1379 = vmul.f32 %v1155, %v1371
        %v1380 = vmul.f32 %v1156, %v1372
        %v1381 = vmul.f32 %v1157, %v1373
        %v1382 = vmul.f32 %v1158, %v1374
        %v1384 = vperm.slane %v692, 0
        %v1387 = vsel %vm657, %v1375, 0
        %v1390 = vsel %vm657, %v1376, 0
        %v1393 = vsel %vm657, %v1377, 0
        %v1396 = vsel %vm657, %v1378, 0
        %v1399 = vsel %vm657, %v1379, 0
        %v1402 = vsel %vm657, %v1380, 0
        %v1405 = vsel %vm657, %v1381, 0
        %v1408 = vsel %vm657, %v1382, 0
        %1410 = vmatpush.msra.mxu0 0.0
        %1411 = vmatpush.msra.mxu0 0.0
        %1412 = vmatpush.msra.mxu0 0.0
        %1413 = vmatpush.msra.mxu0 0.0
        %1414 = vmatpush.msra.mxu0 0.0
        %1415 = vmatpush.msra.mxu0 0.0
        %1416 = vmatpush.msra.mxu0 0.0
        %1417 = vmatpush.msra.mxu0 0.0
        %1418 = vmatpush.msra.mxu0 0.0
        %1419 = vmatpush.msra.mxu0 0.0
        %1420 = vmatpush.msra.mxu0 0.0
        %1421 = vmatpush.msra.mxu0 0.0
        %1422 = vmatpush.msra.mxu0 %v691
        %1423 = vmatpush.msra.mxu0 %v690
        %1424 = vmatpush.msra.mxu0 %v689
        %1425 = vmatpush.msra.mxu0 %v688
        %1426 = vmatmul.f32.gmra.mxu0 %v1387
        %v1427 = vpop.f32.mrf.mxu0
        %v1428 = vadd.f32 %v1384, %v1427
        %1429 = vmatmul.f32.gmra.mxu0 %v1390
        %v1430 = vpop.f32.mrf.mxu0
        %v1431 = vadd.f32 %v1384, %v1430
        %1432 = vmatmul.f32.gmra.mxu0 %v1393
        %v1433 = vpop.f32.mrf.mxu0
        %v1434 = vadd.f32 %v1384, %v1433
        %1435 = vmatmul.f32.gmra.mxu0 %v1396
        %v1436 = vpop.f32.mrf.mxu0
        %v1437 = vadd.f32 %v1384, %v1436
        %1438 = vmatmul.f32.gmra.mxu0 %v1399
        %v1439 = vpop.f32.mrf.mxu0
        %v1440 = vadd.f32 %v1384, %v1439
        %1441 = vmatmul.f32.gmra.mxu0 %v1402
        %v1442 = vpop.f32.mrf.mxu0
        %v1443 = vadd.f32 %v1384, %v1442
        %1444 = vmatmul.f32.gmra.mxu0 %v1405
        %v1445 = vpop.f32.mrf.mxu0
        %v1446 = vadd.f32 %v1384, %v1445
        %1447 = vmatmul.f32.gmra.mxu0 %v1408
        %v1448 = vpop.f32.mrf.mxu0
        %v1449 = vadd.f32 %v1384, %v1448
        %1450 = vdwg.mxu0
        %1451 = vst.msk [vmem:[%s538] sm:$0xff] %vm567, %v1428
        %1452 = vst.msk [vmem:[%s538 + $0x8] sm:$0xff] %vm567, %v1431
        %1453 = vst.msk [vmem:[%s538 + $0x10] sm:$0xff] %vm567, %v1434
        %1454 = vst.msk [vmem:[%s538 + $0x18] sm:$0xff] %vm567, %v1437
        %1455 = vst.msk [vmem:[%s538 + $0x20] sm:$0xff] %vm567, %v1440
        %1456 = vst.msk [vmem:[%s538 + $0x28] sm:$0xff] %vm567, %v1443
        %1457 = vst.msk [vmem:[%s538 + $0x30] sm:$0xff] %vm567, %v1446
        %1458 = vst.msk [vmem:[%s538 + $0x38] sm:$0xff] %vm567, %v1449
        %s1459 = sand.u32 %s321, 1
        %s1460 = scalar_lea.sflag [#allocation5], %s1459
        %s1461 = sand.u32 %s321, 1
        %s1462 = smul.addr %s1461, 64
        %s1463 = scalar_lea.vmem [#allocation9], %s1462
        // Predicated region
        $region85: #{tpu_custom_call.1} parent=63 // pred_check
          %p1464 = pneg %p331
        $region86: #{tpu_custom_call.1} parent=63 // pred_check_branch
          %1466 = sbr.rel (%p1464) target = $region88
        $region87: #{tpu_custom_call.1} parent=63 // pred_region
          %s1467 = smul.u32 4, %s36
          %1469 = vsyncadd %s1460, 0
          %s1470 = smul.addr %s1467, 2
          %s1471 = smul.addr %s35, 32
          %s1472 = sadd.s32 %s1470, %s1471
          %s1473 = smul.addr %s1472, 8
          %s1474 = scalar_lea.hbm %s11, %s1473
          %s1475 = sshll.u32 %s1463, 4
          %s1476 = int_to_ptr.vmem [resolvable:$true] %s1475
          %s1477 = sshll.u32 %s1474, 4
          %s1478 = int_to_ptr.hbm [resolvable:$true] %s1477
          %1483 = dma.vmem_to_hbm [thread:$0]  %s1476, 1024, %s1478, %s1460, 128, 128, 8
        $region88: #{tpu_custom_call.1} parent=63 // pred_fallthru
          _
      $region64: #{tpu_custom_call.1} parent=5 // pred_fallthru
        _
      %p1484 = scmp.le.s32.totalorder 2, %s26
      // Predicated region
      $region89: #{tpu_custom_call.1} parent=5 // pred_check
        %p1485 = pneg %p1484
      $region90: #{tpu_custom_call.1} parent=5 // pred_check_branch
        %1487 = sbr.rel (%p1485) target = $region92
      $region91: #{tpu_custom_call.1} parent=5 // pred_region
        %s1488 = ssub.s32 %s26, 2
        // Predicated region
        $region93: #{tpu_custom_call.1} parent=91 // pred_check
          %p1489 = pneg %p337
        $region94: #{tpu_custom_call.1} parent=91 // pred_check_branch
          %1491 = sbr.rel (%p1489) target = $region96
        $region95: #{tpu_custom_call.1} parent=91 // pred_region
          %s1492 = sand.u32 %s322, 1
          %s1493 = scalar_lea.sflag [#allocation5], %s1492
          %s1494 = sand.u32 %s322, 1
          %s1495 = smul.addr %s1494, 64
          %s1496 = scalar_lea.vmem [#allocation9], %s1495
          %1498 = dma.done %s1493, 1024
        $region96: #{tpu_custom_call.1} parent=91 // pred_fallthru
          _
      $region92: #{tpu_custom_call.1} parent=5 // pred_fallthru
        _
    $region6: #{tpu_custom_call.1} parent=1 // loop_footer
      %s30 = sadd.s32 1, %s26
    $region7: #{tpu_custom_call.1} parent=1 // loop_footer_branch
      %25 = sbr.rel target = $region3
    $region8: #{tpu_custom_call.1} parent=1 // loop_exit
      _
    %1499 = vsyncpa [#allocation4], 1
    %s1500 = scalar_lea.sflag [#allocation4], 1
    %1501 = vsyncpa %s1500, 1
    %1502 = vsyncpa [#allocation7], 1
    %s1503 = scalar_lea.sflag [#allocation7], 1
    %1504 = vsyncpa %s1503, 1
    %1505 = vsyncpa [#allocation5], 1
    %s1506 = scalar_lea.sflag [#allocation5], 1
    %1507 = vsyncpa %s1506, 1

</llo_original>
